<compile_context>
chip_gen: v5e
topology: v5e:2x2
jax: 0.10.0
libtpu: 0.0.40
codegen_flags: <defaults>
</compile_context>

<pallas_src>
import functools

import jax
import jax.numpy as jnp
from jax.experimental import pallas as pl
from jax.experimental.pallas import tpu as pltpu


# ----------------------------------------------------------------------------
# Pallas kernel: one (batch, edge-tile) step of MeshTrans_all_atten forward
# ----------------------------------------------------------------------------
def _mesh_atten_kernel(xf_ref, xt_ref, gi_ref, w_ref, b_ref, out_ref, *, K, topk):
    # xf_ref : (1, C, E_pad)   f32  all edge features of this batch (resident)
    # xt_ref : (1, C, tE)      f32  this edge tile's features (pipelined)
    # gi_ref : (1, 1, K, tE)   i32  this tile's neighbor indices (pipelined)
    # w_ref  : (4, C)          f32  rows: [w_sim_x, w_sim_g, w_rec_x, w_rec_g]
    # b_ref  : (2,)            f32  [b_sim, b_rec] in SMEM
    # out_ref: (1, C, tE)      f32
    C = out_ref.shape[1]
    tE = out_ref.shape[2]
    E_pad = xf_ref.shape[2]

    x_full = xf_ref[0]                                   # (C, E_pad)
    x_tile = xt_ref[0]                                   # (C, tE)
    W = w_ref[...]                                       # (4, C)
    b_sim = b_ref[0]
    b_rec = b_ref[1]

    # "Original feature" halves of both 1x1 convs for this tile (one tiny matmul).
    Pt = jnp.dot(W, x_tile, preferred_element_type=jnp.float32)         # (4, tE)
    sim_base = Pt[0:1, :] + b_sim                                        # (1, tE)
    rec_base = Pt[2:3, :] + b_rec                                        # (1, tE)

    row_iota = jax.lax.broadcasted_iota(jnp.int32, (E_pad, tE), 0)       # [j, e] = j

    # Per-neighbor one-hot gather + both conv logits. Peak intermediate is only
    # (E_pad, tE) regardless of K.
    featg, sims, recw = [], [], []
    for n in range(K):
        idx_n = gi_ref[0, 0, pl.ds(n, 1), :]                             # (1, tE) i32
        onehot = (row_iota == idx_n).astype(jnp.float32)                 # (E_pad, tE); idx==-1 -> zeros
        f_n = jnp.dot(x_full, onehot, preferred_element_type=jnp.float32)  # (C, tE) gathered features
        g_n = jnp.dot(W, f_n, preferred_element_type=jnp.float32)        # (4, tE) gathered logits
        featg.append(f_n)
        sims.append(jax.nn.sigmoid(g_n[1:2, :] + sim_base))              # (1, tE)
        recw.append(jax.nn.sigmoid(g_n[3:4, :] + rec_base))              # (1, tE)

    # top-k (k=topk) over the K neighbors per edge via iterative masked argmax,
    # first-index tie-break (matches torch.topk / lax.top_k). Only (1, tE) ops.
    NEG = jnp.float32(-1e30)
    wsel = [jnp.zeros((1, tE), jnp.float32) for _ in range(K)]
    for _ in range(topk):
        m = sims[0]
        for n in range(1, K):
            m = jnp.maximum(m, sims[n])
        taken = jnp.zeros((1, tE), jnp.bool_)
        for n in range(K):
            sel = jnp.logical_and(sims[n] == m, jnp.logical_not(taken))
            taken = jnp.logical_or(taken, sel)
            wsel[n] = jnp.where(sel, recw[n], wsel[n])
            sims[n] = jnp.where(sel, NEG, sims[n])

    # Weighted sum of the selected neighbors: K FMAs on (C, tE).
    acc = jnp.zeros((C, tE), jnp.float32)
    for n in range(K):
        acc = acc + featg[n] * wsel[n]
    out_ref[0] = x_tile + acc


# ----------------------------------------------------------------------------
# Glue: pad_gemm + pallas_call wrapper
# ----------------------------------------------------------------------------
def _round_up(v, m):
    return ((v + m - 1) // m) * m


def build_padded_gemm(gemm_list, num_edges):
    """pad_gemm: pad each mesh's (edges_count, K) index table with zeros to (E, K)."""
    rows = []
    for g in gemm_list:
        ec = g.shape[0]
        rows.append(jnp.pad(g, ((0, num_edges - ec), (0, 0)))[None])
    return jnp.concatenate(rows, axis=0).astype(jnp.int32)              # (B, E, K)


def mesh_trans_all_atten(x4, gemm_list, Wmat, bvec, *, topk=4, tile_e=512):
    """x4: (B, C, E, 1) f32 (PyTorch NCHW-like). Returns (B, C, E) f32."""
    x = jnp.squeeze(x4, axis=-1).astype(jnp.float32)                    # (B, C, E)
    B, C, E = x.shape
    Gi = build_padded_gemm(gemm_list, E)                                # (B, E, K)
    K = Gi.shape[-1]

    # Lane-dense padding of the edge axis and edge-tile selection.
    E128 = _round_up(E, 128)
    tE = E128 if E128 <= tile_e else _round_up(tile_e, 128)
    E_pad = _round_up(E128, tE)
    nT = E_pad // tE

    x_p = jnp.pad(x, ((0, 0), (0, 0), (0, E_pad - E)))
    # Padded edge columns gather nothing (index -1 -> all-zero one-hot column).
    Gi_p = jnp.pad(Gi, ((0, 0), (0, E_pad - E), (0, 0)), constant_values=-1)
    # (B, E_pad, K) -> (B, nT, K, tE): per-tile, neighbor-major index blocks.
    gi_tiles = (
        jnp.transpose(Gi_p, (0, 2, 1))          # (B, K, E_pad)
        .reshape(B, K, nT, tE)
        .transpose(0, 2, 1, 3)                  # (B, nT, K, tE)
    )

    kernel = functools.partial(_mesh_atten_kernel, K=K, topk=topk)

    cost = pl.CostEstimate(
        flops=int(B * nT * (2 * 4 * C * tE
                            + K * (2 * C * E_pad * tE + 2 * 4 * C * tE)
                            + 2 * K * C * tE)),
        transcendentals=int(B * nT * 2 * K * tE),
        bytes_accessed=int(4 * (B * C * E_pad          # x resident per batch
                                + B * nT * C * tE       # x tiles
                                + B * nT * K * tE       # neighbor indices
                                + B * C * E_pad          # output
                                + 4 * C + 2)),
    )

    out = pl.pallas_call(
        kernel,
        out_shape=jax.ShapeDtypeStruct((B, C, E_pad), jnp.float32),
        grid_spec=pltpu.PrefetchScalarGridSpec(
            num_scalar_prefetch=0,
            grid=(B, nT),
            in_specs=[
                pl.BlockSpec((1, C, E_pad), lambda b, t: (b, 0, 0)),     # x, resident per batch
                pl.BlockSpec((1, C, tE), lambda b, t: (b, 0, t)),        # x, this edge tile
                pl.BlockSpec((1, 1, K, tE), lambda b, t: (b, t, 0, 0)),  # neighbor indices, this tile
                pl.BlockSpec((4, C), lambda b, t: (0, 0)),               # conv weights
                pl.BlockSpec(memory_space=pltpu.MemorySpace.SMEM),       # biases (scalars)
            ],
            out_specs=pl.BlockSpec((1, C, tE), lambda b, t: (b, 0, t)),
        ),
        compiler_params=pltpu.CompilerParams(
            dimension_semantics=("parallel", "parallel")),
        cost_estimate=cost,
    )(x_p, x_p, gi_tiles, Wmat, bvec)
    return out[:, :, :E]


# ----------------------------------------------------------------------------
# Pure-JAX reference (mirrors the PyTorch forward exactly)
# ----------------------------------------------------------------------------
def reference_forward(x4, gemm_list, Wmat, bvec):
    x = jnp.squeeze(x4, axis=-1).astype(jnp.float32)                    # (B, C, E)
    B, C, E = x.shape
    Gi = build_padded_gemm(gemm_list, E)                                # (B, E, K)
    # create_GeMM
    xp = jnp.concatenate([jnp.zeros((B, C, 1), x.dtype), x], axis=2)    # (B, C, E+1)
    idx = Gi + 1
    G = jax.vmap(lambda xb, ib: xb[:, ib])(xp, idx)                     # (B, C, E, K)
    # SimilarityWeightGenerator
    w1x, w1g, w2x, w2g = Wmat[0], Wmat[1], Wmat[2], Wmat[3]
    b1, b2 = bvec[0], bvec[1]
    sim = jax.nn.sigmoid(jnp.einsum('c,bce->be', w1x, x)[:, :, None]
                         + jnp.einsum('c,bcek->bek', w1g, G) + b1)      # (B, E, K)
    _, topi = jax.lax.top_k(sim, 4)                                     # (B, E, 4)
    topi_b = jnp.broadcast_to(topi[:, None, :, :], (B, C, E, 4))
    topf = jnp.take_along_axis(G, topi_b, axis=-1)                      # (B, C, E, 4)
    rec = jax.nn.sigmoid(jnp.einsum('c,bce->be', w2x, x)[:, :, None]
                         + jnp.einsum('c,bcek->bek', w2g, topf) + b2)   # (B, E, 4)
    return x + jnp.sum(topf * rec[:, None, :, :], axis=-1)


# ----------------------------------------------------------------------------
if __name__ == "__main__":
    B, C, E, K = 2, 16, 128, 10        # C is fixed at 16 by the module (2C = 32)
    edges_counts = [100, 128]          # per-mesh edge counts (second mesh unpadded)

    key = jax.random.PRNGKey(0)
    k_gemm, k_x, k_w1, k_w2, k_b = jax.random.split(key, 5)

    # Synthetic mesh.gemm_all tables: (edges_count, 10), values in [-1, edges_count)
    gemm_list = []
    for i, ec in enumerate(edges_counts):
        kk = jax.random.fold_in(k_gemm, i)
        gemm_list.append(jax.random.randint(kk, (ec, K), -1, ec).astype(jnp.int32))

    # Input edge features, PyTorch-style (B, C, E, 1)
    x4 = jax.random.normal(k_x, (B, C, E, 1), dtype=jnp.float32)

    # Deterministic parameters: Conv2d(32 -> 1, 1x1) weights + biases (x2)
    w1 = 0.1 * jax.random.normal(k_w1, (2 * C,), dtype=jnp.float32)     # conv.weight
    w2 = 0.1 * jax.random.normal(k_w2, (2 * C,), dtype=jnp.float32)     # recalculate_conv.weight
    b_all = 0.1 * jax.random.normal(k_b, (2,), dtype=jnp.float32)       # conv.bias, recalc.bias
    Wmat = jnp.stack([w1[:C], w1[C:], w2[:C], w2[C:]], axis=0)          # (4, C)
    bvec = b_all                                                        # (2,)

    out = mesh_trans_all_atten(x4, gemm_list, Wmat, bvec)
    out = jax.block_until_ready(out)

    ref = jax.block_until_ready(reference_forward(x4, gemm_list, Wmat, bvec))
    err = float(jnp.max(jnp.abs(out - ref)))
    assert out.shape == (B, C, E), out.shape
    assert err < 1e-4, f"max abs error {err}"
    print("KERNEL_OK")
</pallas_src>

<mosaic_0001>
module attributes {stable_mosaic.version = 11 : i64} {
  func.func @_mesh_atten_kernel(%arg0: i32, %arg1: i32, %arg2: memref<1x16x128xf32, #tpu.memory_space<vmem>>, %arg3: memref<1x16x128xf32, #tpu.memory_space<vmem>>, %arg4: memref<1x1x10x128xi32, #tpu.memory_space<vmem>>, %arg5: memref<4x16xf32, #tpu.memory_space<vmem>>, %arg6: memref<2xf32, #tpu.memory_space<smem>>, %arg7: memref<1x16x128xf32, #tpu.memory_space<vmem>>) attributes {dimension_semantics = [#tpu.dimension_semantics<parallel>, #tpu.dimension_semantics<parallel>], iteration_bounds = array<i64: 2, 1>, scalar_prefetch = 0 : i64, scratch_operands = 0 : i64, tpu.core_type = #tpu.core_type<tc>, window_params = [{transform_indices = @transform_0, window_bounds = array<i64: 1, 16, 128>}, {transform_indices = @transform_1, window_bounds = array<i64: 1, 16, 128>}, {transform_indices = @transform_2, window_bounds = array<i64: 1, 1, 10, 128>}, {pipeline_mode = #tpu.pipeline_mode<synchronous>, transform_indices = @transform_3, window_bounds = array<i64: 4, 16>}, {transform_indices = @transform_4, window_bounds = array<i64: 2>}, {transform_indices = @transform_5, window_bounds = array<i64: 1, 16, 128>}]} {
    %c0 = arith.constant 0 : index
    %c0_0 = arith.constant 0 : index
    %c0_1 = arith.constant 0 : index
    %0 = vector.load %arg2[%c0, %c0_0, %c0_1] : memref<1x16x128xf32, #tpu.memory_space<vmem>>, vector<1x16x128xf32>
    %1 = vector.shape_cast %0 : vector<1x16x128xf32> to vector<16x128xf32>
    %c0_2 = arith.constant 0 : index
    %c0_3 = arith.constant 0 : index
    %c0_4 = arith.constant 0 : index
    %2 = vector.load %arg3[%c0_2, %c0_3, %c0_4] : memref<1x16x128xf32, #tpu.memory_space<vmem>>, vector<1x16x128xf32>
    %3 = vector.shape_cast %2 : vector<1x16x128xf32> to vector<16x128xf32>
    %c0_5 = arith.constant 0 : index
    %c0_6 = arith.constant 0 : index
    %4 = vector.load %arg5[%c0_5, %c0_6] : memref<4x16xf32, #tpu.memory_space<vmem>>, vector<4x16xf32>
    %c0_7 = arith.constant 0 : index
    %5 = memref.load %arg6[%c0_7] : memref<2xf32, #tpu.memory_space<smem>>
    %c1 = arith.constant 1 : index
    %6 = memref.load %arg6[%c1] : memref<2xf32, #tpu.memory_space<smem>>
    %cst = arith.constant dense<0.000000e+00> : vector<4x128xf32>
    %7 = tpu.matmul %4, %3, %cst {dimension_numbers = #tpu.dot_dimension_numbers<[1], [0], [0], [1], [0, 0, 1, 1], [], []>} : vector<4x16xf32>, vector<16x128xf32>, vector<4x128xf32> -> vector<4x128xf32>
    %8 = vector.extract_strided_slice %7 {offsets = [0, 0], sizes = [1, 128], strides = [1, 1]} : vector<4x128xf32> to vector<1x128xf32>
    %9 = vector.broadcast %5 : f32 to vector<1x128xf32>
    %10 = arith.addf %8, %9 : vector<1x128xf32>
    %11 = vector.extract_strided_slice %7 {offsets = [2, 0], sizes = [1, 128], strides = [1, 1]} : vector<4x128xf32> to vector<1x128xf32>
    %12 = vector.broadcast %6 : f32 to vector<1x128xf32>
    %13 = arith.addf %11, %12 : vector<1x128xf32>
    %14 = tpu.iota {dimensions = array<i32: 0>} : vector<128x128xi32>
    %c0_8 = arith.constant 0 : index
    %c0_9 = arith.constant 0 : index
    %c0_10 = arith.constant 0 : index
    %c0_11 = arith.constant 0 : index
    %15 = vector.load %arg4[%c0_8, %c0_9, %c0_10, %c0_11] : memref<1x1x10x128xi32, #tpu.memory_space<vmem>>, vector<1x1x1x128xi32>
    %16 = vector.shape_cast %15 : vector<1x1x1x128xi32> to vector<1x128xi32>
    %17 = vector.broadcast %16 : vector<1x128xi32> to vector<128x128xi32>
    %18 = arith.cmpi eq, %14, %17 : vector<128x128xi32>
    %19 = arith.extui %18 : vector<128x128xi1> to vector<128x128xi32>
    %20 = arith.sitofp %19 : vector<128x128xi32> to vector<128x128xf32>
    %cst_12 = arith.constant dense<0.000000e+00> : vector<16x128xf32>
    %21 = tpu.matmul %1, %20, %cst_12 {dimension_numbers = #tpu.dot_dimension_numbers<[1], [0], [0], [1], [0, 0, 1, 1], [], []>} : vector<16x128xf32>, vector<128x128xf32>, vector<16x128xf32> -> vector<16x128xf32>
    %cst_13 = arith.constant dense<0.000000e+00> : vector<4x128xf32>
    %22 = tpu.matmul %4, %21, %cst_13 {dimension_numbers = #tpu.dot_dimension_numbers<[1], [0], [0], [1], [0, 0, 1, 1], [], []>} : vector<4x16xf32>, vector<16x128xf32>, vector<4x128xf32> -> vector<4x128xf32>
    %23 = vector.extract_strided_slice %22 {offsets = [1, 0], sizes = [1, 128], strides = [1, 1]} : vector<4x128xf32> to vector<1x128xf32>
    %24 = arith.addf %23, %10 : vector<1x128xf32>
    %25 = arith.negf %24 : vector<1x128xf32>
    %26 = math.exp %25 : vector<1x128xf32>
    %cst_14 = arith.constant 1.000000e+00 : f32
    %27 = vector.broadcast %cst_14 : f32 to vector<1x128xf32>
    %28 = arith.addf %27, %26 : vector<1x128xf32>
    %29 = arith.divf %27, %28 : vector<1x128xf32>
    %30 = vector.extract_strided_slice %22 {offsets = [3, 0], sizes = [1, 128], strides = [1, 1]} : vector<4x128xf32> to vector<1x128xf32>
    %31 = arith.addf %30, %13 : vector<1x128xf32>
    %32 = arith.negf %31 : vector<1x128xf32>
    %33 = math.exp %32 : vector<1x128xf32>
    %cst_15 = arith.constant 1.000000e+00 : f32
    %34 = vector.broadcast %cst_15 : f32 to vector<1x128xf32>
    %35 = arith.addf %34, %33 : vector<1x128xf32>
    %36 = arith.divf %34, %35 : vector<1x128xf32>
    %c0_16 = arith.constant 0 : index
    %c0_17 = arith.constant 0 : index
    %c1_18 = arith.constant 1 : index
    %c0_19 = arith.constant 0 : index
    %37 = vector.load %arg4[%c0_16, %c0_17, %c1_18, %c0_19] : memref<1x1x10x128xi32, #tpu.memory_space<vmem>>, vector<1x1x1x128xi32>
    %38 = vector.shape_cast %37 : vector<1x1x1x128xi32> to vector<1x128xi32>
    %39 = vector.broadcast %38 : vector<1x128xi32> to vector<128x128xi32>
    %40 = arith.cmpi eq, %14, %39 : vector<128x128xi32>
    %41 = arith.extui %40 : vector<128x128xi1> to vector<128x128xi32>
    %42 = arith.sitofp %41 : vector<128x128xi32> to vector<128x128xf32>
    %cst_20 = arith.constant dense<0.000000e+00> : vector<16x128xf32>
    %43 = tpu.matmul %1, %42, %cst_20 {dimension_numbers = #tpu.dot_dimension_numbers<[1], [0], [0], [1], [0, 0, 1, 1], [], []>} : vector<16x128xf32>, vector<128x128xf32>, vector<16x128xf32> -> vector<16x128xf32>
    %cst_21 = arith.constant dense<0.000000e+00> : vector<4x128xf32>
    %44 = tpu.matmul %4, %43, %cst_21 {dimension_numbers = #tpu.dot_dimension_numbers<[1], [0], [0], [1], [0, 0, 1, 1], [], []>} : vector<4x16xf32>, vector<16x128xf32>, vector<4x128xf32> -> vector<4x128xf32>
    %45 = vector.extract_strided_slice %44 {offsets = [1, 0], sizes = [1, 128], strides = [1, 1]} : vector<4x128xf32> to vector<1x128xf32>
    %46 = arith.addf %45, %10 : vector<1x128xf32>
    %47 = arith.negf %46 : vector<1x128xf32>
    %48 = math.exp %47 : vector<1x128xf32>
    %cst_22 = arith.constant 1.000000e+00 : f32
    %49 = vector.broadcast %cst_22 : f32 to vector<1x128xf32>
    %50 = arith.addf %49, %48 : vector<1x128xf32>
    %51 = arith.divf %49, %50 : vector<1x128xf32>
    %52 = vector.extract_strided_slice %44 {offsets = [3, 0], sizes = [1, 128], strides = [1, 1]} : vector<4x128xf32> to vector<1x128xf32>
    %53 = arith.addf %52, %13 : vector<1x128xf32>
    %54 = arith.negf %53 : vector<1x128xf32>
    %55 = math.exp %54 : vector<1x128xf32>
    %cst_23 = arith.constant 1.000000e+00 : f32
    %56 = vector.broadcast %cst_23 : f32 to vector<1x128xf32>
    %57 = arith.addf %56, %55 : vector<1x128xf32>
    %58 = arith.divf %56, %57 : vector<1x128xf32>
    %c0_24 = arith.constant 0 : index
    %c0_25 = arith.constant 0 : index
    %c2 = arith.constant 2 : index
    %c0_26 = arith.constant 0 : index
    %59 = vector.load %arg4[%c0_24, %c0_25, %c2, %c0_26] : memref<1x1x10x128xi32, #tpu.memory_space<vmem>>, vector<1x1x1x128xi32>
    %60 = vector.shape_cast %59 : vector<1x1x1x128xi32> to vector<1x128xi32>
    %61 = vector.broadcast %60 : vector<1x128xi32> to vector<128x128xi32>
    %62 = arith.cmpi eq, %14, %61 : vector<128x128xi32>
    %63 = arith.extui %62 : vector<128x128xi1> to vector<128x128xi32>
    %64 = arith.sitofp %63 : vector<128x128xi32> to vector<128x128xf32>
    %cst_27 = arith.constant dense<0.000000e+00> : vector<16x128xf32>
    %65 = tpu.matmul %1, %64, %cst_27 {dimension_numbers = #tpu.dot_dimension_numbers<[1], [0], [0], [1], [0, 0, 1, 1], [], []>} : vector<16x128xf32>, vector<128x128xf32>, vector<16x128xf32> -> vector<16x128xf32>
    %cst_28 = arith.constant dense<0.000000e+00> : vector<4x128xf32>
    %66 = tpu.matmul %4, %65, %cst_28 {dimension_numbers = #tpu.dot_dimension_numbers<[1], [0], [0], [1], [0, 0, 1, 1], [], []>} : vector<4x16xf32>, vector<16x128xf32>, vector<4x128xf32> -> vector<4x128xf32>
    %67 = vector.extract_strided_slice %66 {offsets = [1, 0], sizes = [1, 128], strides = [1, 1]} : vector<4x128xf32> to vector<1x128xf32>
    %68 = arith.addf %67, %10 : vector<1x128xf32>
    %69 = arith.negf %68 : vector<1x128xf32>
    %70 = math.exp %69 : vector<1x128xf32>
    %cst_29 = arith.constant 1.000000e+00 : f32
    %71 = vector.broadcast %cst_29 : f32 to vector<1x128xf32>
    %72 = arith.addf %71, %70 : vector<1x128xf32>
    %73 = arith.divf %71, %72 : vector<1x128xf32>
    %74 = vector.extract_strided_slice %66 {offsets = [3, 0], sizes = [1, 128], strides = [1, 1]} : vector<4x128xf32> to vector<1x128xf32>
    %75 = arith.addf %74, %13 : vector<1x128xf32>
    %76 = arith.negf %75 : vector<1x128xf32>
    %77 = math.exp %76 : vector<1x128xf32>
    %cst_30 = arith.constant 1.000000e+00 : f32
    %78 = vector.broadcast %cst_30 : f32 to vector<1x128xf32>
    %79 = arith.addf %78, %77 : vector<1x128xf32>
    %80 = arith.divf %78, %79 : vector<1x128xf32>
    %c0_31 = arith.constant 0 : index
    %c0_32 = arith.constant 0 : index
    %c3 = arith.constant 3 : index
    %c0_33 = arith.constant 0 : index
    %81 = vector.load %arg4[%c0_31, %c0_32, %c3, %c0_33] : memref<1x1x10x128xi32, #tpu.memory_space<vmem>>, vector<1x1x1x128xi32>
    %82 = vector.shape_cast %81 : vector<1x1x1x128xi32> to vector<1x128xi32>
    %83 = vector.broadcast %82 : vector<1x128xi32> to vector<128x128xi32>
    %84 = arith.cmpi eq, %14, %83 : vector<128x128xi32>
    %85 = arith.extui %84 : vector<128x128xi1> to vector<128x128xi32>
    %86 = arith.sitofp %85 : vector<128x128xi32> to vector<128x128xf32>
    %cst_34 = arith.constant dense<0.000000e+00> : vector<16x128xf32>
    %87 = tpu.matmul %1, %86, %cst_34 {dimension_numbers = #tpu.dot_dimension_numbers<[1], [0], [0], [1], [0, 0, 1, 1], [], []>} : vector<16x128xf32>, vector<128x128xf32>, vector<16x128xf32> -> vector<16x128xf32>
    %cst_35 = arith.constant dense<0.000000e+00> : vector<4x128xf32>
    %88 = tpu.matmul %4, %87, %cst_35 {dimension_numbers = #tpu.dot_dimension_numbers<[1], [0], [0], [1], [0, 0, 1, 1], [], []>} : vector<4x16xf32>, vector<16x128xf32>, vector<4x128xf32> -> vector<4x128xf32>
    %89 = vector.extract_strided_slice %88 {offsets = [1, 0], sizes = [1, 128], strides = [1, 1]} : vector<4x128xf32> to vector<1x128xf32>
    %90 = arith.addf %89, %10 : vector<1x128xf32>
    %91 = arith.negf %90 : vector<1x128xf32>
    %92 = math.exp %91 : vector<1x128xf32>
    %cst_36 = arith.constant 1.000000e+00 : f32
    %93 = vector.broadcast %cst_36 : f32 to vector<1x128xf32>
    %94 = arith.addf %93, %92 : vector<1x128xf32>
    %95 = arith.divf %93, %94 : vector<1x128xf32>
    %96 = vector.extract_strided_slice %88 {offsets = [3, 0], sizes = [1, 128], strides = [1, 1]} : vector<4x128xf32> to vector<1x128xf32>
    %97 = arith.addf %96, %13 : vector<1x128xf32>
    %98 = arith.negf %97 : vector<1x128xf32>
    %99 = math.exp %98 : vector<1x128xf32>
    %cst_37 = arith.constant 1.000000e+00 : f32
    %100 = vector.broadcast %cst_37 : f32 to vector<1x128xf32>
    %101 = arith.addf %100, %99 : vector<1x128xf32>
    %102 = arith.divf %100, %101 : vector<1x128xf32>
    %c0_38 = arith.constant 0 : index
    %c0_39 = arith.constant 0 : index
    %c4 = arith.constant 4 : index
    %c0_40 = arith.constant 0 : index
    %103 = vector.load %arg4[%c0_38, %c0_39, %c4, %c0_40] : memref<1x1x10x128xi32, #tpu.memory_space<vmem>>, vector<1x1x1x128xi32>
    %104 = vector.shape_cast %103 : vector<1x1x1x128xi32> to vector<1x128xi32>
    %105 = vector.broadcast %104 : vector<1x128xi32> to vector<128x128xi32>
    %106 = arith.cmpi eq, %14, %105 : vector<128x128xi32>
    %107 = arith.extui %106 : vector<128x128xi1> to vector<128x128xi32>
    %108 = arith.sitofp %107 : vector<128x128xi32> to vector<128x128xf32>
    %cst_41 = arith.constant dense<0.000000e+00> : vector<16x128xf32>
    %109 = tpu.matmul %1, %108, %cst_41 {dimension_numbers = #tpu.dot_dimension_numbers<[1], [0], [0], [1], [0, 0, 1, 1], [], []>} : vector<16x128xf32>, vector<128x128xf32>, vector<16x128xf32> -> vector<16x128xf32>
    %cst_42 = arith.constant dense<0.000000e+00> : vector<4x128xf32>
    %110 = tpu.matmul %4, %109, %cst_42 {dimension_numbers = #tpu.dot_dimension_numbers<[1], [0], [0], [1], [0, 0, 1, 1], [], []>} : vector<4x16xf32>, vector<16x128xf32>, vector<4x128xf32> -> vector<4x128xf32>
    %111 = vector.extract_strided_slice %110 {offsets = [1, 0], sizes = [1, 128], strides = [1, 1]} : vector<4x128xf32> to vector<1x128xf32>
    %112 = arith.addf %111, %10 : vector<1x128xf32>
    %113 = arith.negf %112 : vector<1x128xf32>
    %114 = math.exp %113 : vector<1x128xf32>
    %cst_43 = arith.constant 1.000000e+00 : f32
    %115 = vector.broadcast %cst_43 : f32 to vector<1x128xf32>
    %116 = arith.addf %115, %114 : vector<1x128xf32>
    %117 = arith.divf %115, %116 : vector<1x128xf32>
    %118 = vector.extract_strided_slice %110 {offsets = [3, 0], sizes = [1, 128], strides = [1, 1]} : vector<4x128xf32> to vector<1x128xf32>
    %119 = arith.addf %118, %13 : vector<1x128xf32>
    %120 = arith.negf %119 : vector<1x128xf32>
    %121 = math.exp %120 : vector<1x128xf32>
    %cst_44 = arith.constant 1.000000e+00 : f32
    %122 = vector.broadcast %cst_44 : f32 to vector<1x128xf32>
    %123 = arith.addf %122, %121 : vector<1x128xf32>
    %124 = arith.divf %122, %123 : vector<1x128xf32>
    %c0_45 = arith.constant 0 : index
    %c0_46 = arith.constant 0 : index
    %c5 = arith.constant 5 : index
    %c0_47 = arith.constant 0 : index
    %125 = vector.load %arg4[%c0_45, %c0_46, %c5, %c0_47] : memref<1x1x10x128xi32, #tpu.memory_space<vmem>>, vector<1x1x1x128xi32>
    %126 = vector.shape_cast %125 : vector<1x1x1x128xi32> to vector<1x128xi32>
    %127 = vector.broadcast %126 : vector<1x128xi32> to vector<128x128xi32>
    %128 = arith.cmpi eq, %14, %127 : vector<128x128xi32>
    %129 = arith.extui %128 : vector<128x128xi1> to vector<128x128xi32>
    %130 = arith.sitofp %129 : vector<128x128xi32> to vector<128x128xf32>
    %cst_48 = arith.constant dense<0.000000e+00> : vector<16x128xf32>
    %131 = tpu.matmul %1, %130, %cst_48 {dimension_numbers = #tpu.dot_dimension_numbers<[1], [0], [0], [1], [0, 0, 1, 1], [], []>} : vector<16x128xf32>, vector<128x128xf32>, vector<16x128xf32> -> vector<16x128xf32>
    %cst_49 = arith.constant dense<0.000000e+00> : vector<4x128xf32>
    %132 = tpu.matmul %4, %131, %cst_49 {dimension_numbers = #tpu.dot_dimension_numbers<[1], [0], [0], [1], [0, 0, 1, 1], [], []>} : vector<4x16xf32>, vector<16x128xf32>, vector<4x128xf32> -> vector<4x128xf32>
    %133 = vector.extract_strided_slice %132 {offsets = [1, 0], sizes = [1, 128], strides = [1, 1]} : vector<4x128xf32> to vector<1x128xf32>
    %134 = arith.addf %133, %10 : vector<1x128xf32>
    %135 = arith.negf %134 : vector<1x128xf32>
    %136 = math.exp %135 : vector<1x128xf32>
    %cst_50 = arith.constant 1.000000e+00 : f32
    %137 = vector.broadcast %cst_50 : f32 to vector<1x128xf32>
    %138 = arith.addf %137, %136 : vector<1x128xf32>
    %139 = arith.divf %137, %138 : vector<1x128xf32>
    %140 = vector.extract_strided_slice %132 {offsets = [3, 0], sizes = [1, 128], strides = [1, 1]} : vector<4x128xf32> to vector<1x128xf32>
    %141 = arith.addf %140, %13 : vector<1x128xf32>
    %142 = arith.negf %141 : vector<1x128xf32>
    %143 = math.exp %142 : vector<1x128xf32>
    %cst_51 = arith.constant 1.000000e+00 : f32
    %144 = vector.broadcast %cst_51 : f32 to vector<1x128xf32>
    %145 = arith.addf %144, %143 : vector<1x128xf32>
    %146 = arith.divf %144, %145 : vector<1x128xf32>
    %c0_52 = arith.constant 0 : index
    %c0_53 = arith.constant 0 : index
    %c6 = arith.constant 6 : index
    %c0_54 = arith.constant 0 : index
    %147 = vector.load %arg4[%c0_52, %c0_53, %c6, %c0_54] : memref<1x1x10x128xi32, #tpu.memory_space<vmem>>, vector<1x1x1x128xi32>
    %148 = vector.shape_cast %147 : vector<1x1x1x128xi32> to vector<1x128xi32>
    %149 = vector.broadcast %148 : vector<1x128xi32> to vector<128x128xi32>
    %150 = arith.cmpi eq, %14, %149 : vector<128x128xi32>
    %151 = arith.extui %150 : vector<128x128xi1> to vector<128x128xi32>
    %152 = arith.sitofp %151 : vector<128x128xi32> to vector<128x128xf32>
    %cst_55 = arith.constant dense<0.000000e+00> : vector<16x128xf32>
    %153 = tpu.matmul %1, %152, %cst_55 {dimension_numbers = #tpu.dot_dimension_numbers<[1], [0], [0], [1], [0, 0, 1, 1], [], []>} : vector<16x128xf32>, vector<128x128xf32>, vector<16x128xf32> -> vector<16x128xf32>
    %cst_56 = arith.constant dense<0.000000e+00> : vector<4x128xf32>
    %154 = tpu.matmul %4, %153, %cst_56 {dimension_numbers = #tpu.dot_dimension_numbers<[1], [0], [0], [1], [0, 0, 1, 1], [], []>} : vector<4x16xf32>, vector<16x128xf32>, vector<4x128xf32> -> vector<4x128xf32>
    %155 = vector.extract_strided_slice %154 {offsets = [1, 0], sizes = [1, 128], strides = [1, 1]} : vector<4x128xf32> to vector<1x128xf32>
    %156 = arith.addf %155, %10 : vector<1x128xf32>
    %157 = arith.negf %156 : vector<1x128xf32>
    %158 = math.exp %157 : vector<1x128xf32>
    %cst_57 = arith.constant 1.000000e+00 : f32
    %159 = vector.broadcast %cst_57 : f32 to vector<1x128xf32>
    %160 = arith.addf %159, %158 : vector<1x128xf32>
    %161 = arith.divf %159, %160 : vector<1x128xf32>
    %162 = vector.extract_strided_slice %154 {offsets = [3, 0], sizes = [1, 128], strides = [1, 1]} : vector<4x128xf32> to vector<1x128xf32>
    %163 = arith.addf %162, %13 : vector<1x128xf32>
    %164 = arith.negf %163 : vector<1x128xf32>
    %165 = math.exp %164 : vector<1x128xf32>
    %cst_58 = arith.constant 1.000000e+00 : f32
    %166 = vector.broadcast %cst_58 : f32 to vector<1x128xf32>
    %167 = arith.addf %166, %165 : vector<1x128xf32>
    %168 = arith.divf %166, %167 : vector<1x128xf32>
    %c0_59 = arith.constant 0 : index
    %c0_60 = arith.constant 0 : index
    %c7 = arith.constant 7 : index
    %c0_61 = arith.constant 0 : index
    %169 = vector.load %arg4[%c0_59, %c0_60, %c7, %c0_61] : memref<1x1x10x128xi32, #tpu.memory_space<vmem>>, vector<1x1x1x128xi32>
    %170 = vector.shape_cast %169 : vector<1x1x1x128xi32> to vector<1x128xi32>
    %171 = vector.broadcast %170 : vector<1x128xi32> to vector<128x128xi32>
    %172 = arith.cmpi eq, %14, %171 : vector<128x128xi32>
    %173 = arith.extui %172 : vector<128x128xi1> to vector<128x128xi32>
    %174 = arith.sitofp %173 : vector<128x128xi32> to vector<128x128xf32>
    %cst_62 = arith.constant dense<0.000000e+00> : vector<16x128xf32>
    %175 = tpu.matmul %1, %174, %cst_62 {dimension_numbers = #tpu.dot_dimension_numbers<[1], [0], [0], [1], [0, 0, 1, 1], [], []>} : vector<16x128xf32>, vector<128x128xf32>, vector<16x128xf32> -> vector<16x128xf32>
    %cst_63 = arith.constant dense<0.000000e+00> : vector<4x128xf32>
    %176 = tpu.matmul %4, %175, %cst_63 {dimension_numbers = #tpu.dot_dimension_numbers<[1], [0], [0], [1], [0, 0, 1, 1], [], []>} : vector<4x16xf32>, vector<16x128xf32>, vector<4x128xf32> -> vector<4x128xf32>
    %177 = vector.extract_strided_slice %176 {offsets = [1, 0], sizes = [1, 128], strides = [1, 1]} : vector<4x128xf32> to vector<1x128xf32>
    %178 = arith.addf %177, %10 : vector<1x128xf32>
    %179 = arith.negf %178 : vector<1x128xf32>
    %180 = math.exp %179 : vector<1x128xf32>
    %cst_64 = arith.constant 1.000000e+00 : f32
    %181 = vector.broadcast %cst_64 : f32 to vector<1x128xf32>
    %182 = arith.addf %181, %180 : vector<1x128xf32>
    %183 = arith.divf %181, %182 : vector<1x128xf32>
    %184 = vector.extract_strided_slice %176 {offsets = [3, 0], sizes = [1, 128], strides = [1, 1]} : vector<4x128xf32> to vector<1x128xf32>
    %185 = arith.addf %184, %13 : vector<1x128xf32>
    %186 = arith.negf %185 : vector<1x128xf32>
    %187 = math.exp %186 : vector<1x128xf32>
    %cst_65 = arith.constant 1.000000e+00 : f32
    %188 = vector.broadcast %cst_65 : f32 to vector<1x128xf32>
    %189 = arith.addf %188, %187 : vector<1x128xf32>
    %190 = arith.divf %188, %189 : vector<1x128xf32>
    %c0_66 = arith.constant 0 : index
    %c0_67 = arith.constant 0 : index
    %c8 = arith.constant 8 : index
    %c0_68 = arith.constant 0 : index
    %191 = vector.load %arg4[%c0_66, %c0_67, %c8, %c0_68] : memref<1x1x10x128xi32, #tpu.memory_space<vmem>>, vector<1x1x1x128xi32>
    %192 = vector.shape_cast %191 : vector<1x1x1x128xi32> to vector<1x128xi32>
    %193 = vector.broadcast %192 : vector<1x128xi32> to vector<128x128xi32>
    %194 = arith.cmpi eq, %14, %193 : vector<128x128xi32>
    %195 = arith.extui %194 : vector<128x128xi1> to vector<128x128xi32>
    %196 = arith.sitofp %195 : vector<128x128xi32> to vector<128x128xf32>
    %cst_69 = arith.constant dense<0.000000e+00> : vector<16x128xf32>
    %197 = tpu.matmul %1, %196, %cst_69 {dimension_numbers = #tpu.dot_dimension_numbers<[1], [0], [0], [1], [0, 0, 1, 1], [], []>} : vector<16x128xf32>, vector<128x128xf32>, vector<16x128xf32> -> vector<16x128xf32>
    %cst_70 = arith.constant dense<0.000000e+00> : vector<4x128xf32>
    %198 = tpu.matmul %4, %197, %cst_70 {dimension_numbers = #tpu.dot_dimension_numbers<[1], [0], [0], [1], [0, 0, 1, 1], [], []>} : vector<4x16xf32>, vector<16x128xf32>, vector<4x128xf32> -> vector<4x128xf32>
    %199 = vector.extract_strided_slice %198 {offsets = [1, 0], sizes = [1, 128], strides = [1, 1]} : vector<4x128xf32> to vector<1x128xf32>
    %200 = arith.addf %199, %10 : vector<1x128xf32>
    %201 = arith.negf %200 : vector<1x128xf32>
    %202 = math.exp %201 : vector<1x128xf32>
    %cst_71 = arith.constant 1.000000e+00 : f32
    %203 = vector.broadcast %cst_71 : f32 to vector<1x128xf32>
    %204 = arith.addf %203, %202 : vector<1x128xf32>
    %205 = arith.divf %203, %204 : vector<1x128xf32>
    %206 = vector.extract_strided_slice %198 {offsets = [3, 0], sizes = [1, 128], strides = [1, 1]} : vector<4x128xf32> to vector<1x128xf32>
    %207 = arith.addf %206, %13 : vector<1x128xf32>
    %208 = arith.negf %207 : vector<1x128xf32>
    %209 = math.exp %208 : vector<1x128xf32>
    %cst_72 = arith.constant 1.000000e+00 : f32
    %210 = vector.broadcast %cst_72 : f32 to vector<1x128xf32>
    %211 = arith.addf %210, %209 : vector<1x128xf32>
    %212 = arith.divf %210, %211 : vector<1x128xf32>
    %c0_73 = arith.constant 0 : index
    %c0_74 = arith.constant 0 : index
    %c9 = arith.constant 9 : index
    %c0_75 = arith.constant 0 : index
    %213 = vector.load %arg4[%c0_73, %c0_74, %c9, %c0_75] : memref<1x1x10x128xi32, #tpu.memory_space<vmem>>, vector<1x1x1x128xi32>
    %214 = vector.shape_cast %213 : vector<1x1x1x128xi32> to vector<1x128xi32>
    %215 = vector.broadcast %214 : vector<1x128xi32> to vector<128x128xi32>
    %216 = arith.cmpi eq, %14, %215 : vector<128x128xi32>
    %217 = arith.extui %216 : vector<128x128xi1> to vector<128x128xi32>
    %218 = arith.sitofp %217 : vector<128x128xi32> to vector<128x128xf32>
    %cst_76 = arith.constant dense<0.000000e+00> : vector<16x128xf32>
    %219 = tpu.matmul %1, %218, %cst_76 {dimension_numbers = #tpu.dot_dimension_numbers<[1], [0], [0], [1], [0, 0, 1, 1], [], []>} : vector<16x128xf32>, vector<128x128xf32>, vector<16x128xf32> -> vector<16x128xf32>
    %cst_77 = arith.constant dense<0.000000e+00> : vector<4x128xf32>
    %220 = tpu.matmul %4, %219, %cst_77 {dimension_numbers = #tpu.dot_dimension_numbers<[1], [0], [0], [1], [0, 0, 1, 1], [], []>} : vector<4x16xf32>, vector<16x128xf32>, vector<4x128xf32> -> vector<4x128xf32>
    %221 = vector.extract_strided_slice %220 {offsets = [1, 0], sizes = [1, 128], strides = [1, 1]} : vector<4x128xf32> to vector<1x128xf32>
    %222 = arith.addf %221, %10 : vector<1x128xf32>
    %223 = arith.negf %222 : vector<1x128xf32>
    %224 = math.exp %223 : vector<1x128xf32>
    %cst_78 = arith.constant 1.000000e+00 : f32
    %225 = vector.broadcast %cst_78 : f32 to vector<1x128xf32>
    %226 = arith.addf %225, %224 : vector<1x128xf32>
    %227 = arith.divf %225, %226 : vector<1x128xf32>
    %228 = vector.extract_strided_slice %220 {offsets = [3, 0], sizes = [1, 128], strides = [1, 1]} : vector<4x128xf32> to vector<1x128xf32>
    %229 = arith.addf %228, %13 : vector<1x128xf32>
    %230 = arith.negf %229 : vector<1x128xf32>
    %231 = math.exp %230 : vector<1x128xf32>
    %cst_79 = arith.constant 1.000000e+00 : f32
    %232 = vector.broadcast %cst_79 : f32 to vector<1x128xf32>
    %233 = arith.addf %232, %231 : vector<1x128xf32>
    %234 = arith.divf %232, %233 : vector<1x128xf32>
    %cst_80 = arith.constant 0.000000e+00 : f32
    %235 = vector.broadcast %cst_80 : f32 to vector<1x128xf32>
    %cst_81 = arith.constant 0.000000e+00 : f32
    %236 = vector.broadcast %cst_81 : f32 to vector<1x128xf32>
    %cst_82 = arith.constant 0.000000e+00 : f32
    %237 = vector.broadcast %cst_82 : f32 to vector<1x128xf32>
    %cst_83 = arith.constant 0.000000e+00 : f32
    %238 = vector.broadcast %cst_83 : f32 to vector<1x128xf32>
    %cst_84 = arith.constant 0.000000e+00 : f32
    %239 = vector.broadcast %cst_84 : f32 to vector<1x128xf32>
    %cst_85 = arith.constant 0.000000e+00 : f32
    %240 = vector.broadcast %cst_85 : f32 to vector<1x128xf32>
    %cst_86 = arith.constant 0.000000e+00 : f32
    %241 = vector.broadcast %cst_86 : f32 to vector<1x128xf32>
    %cst_87 = arith.constant 0.000000e+00 : f32
    %242 = vector.broadcast %cst_87 : f32 to vector<1x128xf32>
    %cst_88 = arith.constant 0.000000e+00 : f32
    %243 = vector.broadcast %cst_88 : f32 to vector<1x128xf32>
    %cst_89 = arith.constant 0.000000e+00 : f32
    %244 = vector.broadcast %cst_89 : f32 to vector<1x128xf32>
    %245 = arith.maximumf %29, %51 : vector<1x128xf32>
    %246 = arith.maximumf %245, %73 : vector<1x128xf32>
    %247 = arith.maximumf %246, %95 : vector<1x128xf32>
    %248 = arith.maximumf %247, %117 : vector<1x128xf32>
    %249 = arith.maximumf %248, %139 : vector<1x128xf32>
    %250 = arith.maximumf %249, %161 : vector<1x128xf32>
    %251 = arith.maximumf %250, %183 : vector<1x128xf32>
    %252 = arith.maximumf %251, %205 : vector<1x128xf32>
    %253 = arith.maximumf %252, %227 : vector<1x128xf32>
    %false = arith.constant false
    %254 = vector.broadcast %false : i1 to vector<1x128xi1>
    %255 = arith.cmpf oeq, %29, %253 : vector<1x128xf32>
    %cst_90 = arith.constant dense<true> : vector<1x128xi1>
    %256 = arith.xori %254, %cst_90 : vector<1x128xi1>
    %257 = arith.andi %255, %256 : vector<1x128xi1>
    %258 = arith.ori %254, %257 : vector<1x128xi1>
    %259 = arith.select %257, %36, %235 : vector<1x128xi1>, vector<1x128xf32>
    %cst_91 = arith.constant -1.000000e+30 : f32
    %260 = vector.broadcast %cst_91 : f32 to vector<1x128xf32>
    %261 = arith.select %257, %260, %29 : vector<1x128xi1>, vector<1x128xf32>
    %262 = arith.cmpf oeq, %51, %253 : vector<1x128xf32>
    %cst_92 = arith.constant dense<true> : vector<1x128xi1>
    %263 = arith.xori %258, %cst_92 : vector<1x128xi1>
    %264 = arith.andi %262, %263 : vector<1x128xi1>
    %265 = arith.ori %258, %264 : vector<1x128xi1>
    %266 = arith.select %264, %58, %236 : vector<1x128xi1>, vector<1x128xf32>
    %cst_93 = arith.constant -1.000000e+30 : f32
    %267 = vector.broadcast %cst_93 : f32 to vector<1x128xf32>
    %268 = arith.select %264, %267, %51 : vector<1x128xi1>, vector<1x128xf32>
    %269 = arith.cmpf oeq, %73, %253 : vector<1x128xf32>
    %cst_94 = arith.constant dense<true> : vector<1x128xi1>
    %270 = arith.xori %265, %cst_94 : vector<1x128xi1>
    %271 = arith.andi %269, %270 : vector<1x128xi1>
    %272 = arith.ori %265, %271 : vector<1x128xi1>
    %273 = arith.select %271, %80, %237 : vector<1x128xi1>, vector<1x128xf32>
    %cst_95 = arith.constant -1.000000e+30 : f32
    %274 = vector.broadcast %cst_95 : f32 to vector<1x128xf32>
    %275 = arith.select %271, %274, %73 : vector<1x128xi1>, vector<1x128xf32>
    %276 = arith.cmpf oeq, %95, %253 : vector<1x128xf32>
    %cst_96 = arith.constant dense<true> : vector<1x128xi1>
    %277 = arith.xori %272, %cst_96 : vector<1x128xi1>
    %278 = arith.andi %276, %277 : vector<1x128xi1>
    %279 = arith.ori %272, %278 : vector<1x128xi1>
    %280 = arith.select %278, %102, %238 : vector<1x128xi1>, vector<1x128xf32>
    %cst_97 = arith.constant -1.000000e+30 : f32
    %281 = vector.broadcast %cst_97 : f32 to vector<1x128xf32>
    %282 = arith.select %278, %281, %95 : vector<1x128xi1>, vector<1x128xf32>
    %283 = arith.cmpf oeq, %117, %253 : vector<1x128xf32>
    %cst_98 = arith.constant dense<true> : vector<1x128xi1>
    %284 = arith.xori %279, %cst_98 : vector<1x128xi1>
    %285 = arith.andi %283, %284 : vector<1x128xi1>
    %286 = arith.ori %279, %285 : vector<1x128xi1>
    %287 = arith.select %285, %124, %239 : vector<1x128xi1>, vector<1x128xf32>
    %cst_99 = arith.constant -1.000000e+30 : f32
    %288 = vector.broadcast %cst_99 : f32 to vector<1x128xf32>
    %289 = arith.select %285, %288, %117 : vector<1x128xi1>, vector<1x128xf32>
    %290 = arith.cmpf oeq, %139, %253 : vector<1x128xf32>
    %cst_100 = arith.constant dense<true> : vector<1x128xi1>
    %291 = arith.xori %286, %cst_100 : vector<1x128xi1>
    %292 = arith.andi %290, %291 : vector<1x128xi1>
    %293 = arith.ori %286, %292 : vector<1x128xi1>
    %294 = arith.select %292, %146, %240 : vector<1x128xi1>, vector<1x128xf32>
    %cst_101 = arith.constant -1.000000e+30 : f32
    %295 = vector.broadcast %cst_101 : f32 to vector<1x128xf32>
    %296 = arith.select %292, %295, %139 : vector<1x128xi1>, vector<1x128xf32>
    %297 = arith.cmpf oeq, %161, %253 : vector<1x128xf32>
    %cst_102 = arith.constant dense<true> : vector<1x128xi1>
    %298 = arith.xori %293, %cst_102 : vector<1x128xi1>
    %299 = arith.andi %297, %298 : vector<1x128xi1>
    %300 = arith.ori %293, %299 : vector<1x128xi1>
    %301 = arith.select %299, %168, %241 : vector<1x128xi1>, vector<1x128xf32>
    %cst_103 = arith.constant -1.000000e+30 : f32
    %302 = vector.broadcast %cst_103 : f32 to vector<1x128xf32>
    %303 = arith.select %299, %302, %161 : vector<1x128xi1>, vector<1x128xf32>
    %304 = arith.cmpf oeq, %183, %253 : vector<1x128xf32>
    %cst_104 = arith.constant dense<true> : vector<1x128xi1>
    %305 = arith.xori %300, %cst_104 : vector<1x128xi1>
    %306 = arith.andi %304, %305 : vector<1x128xi1>
    %307 = arith.ori %300, %306 : vector<1x128xi1>
    %308 = arith.select %306, %190, %242 : vector<1x128xi1>, vector<1x128xf32>
    %cst_105 = arith.constant -1.000000e+30 : f32
    %309 = vector.broadcast %cst_105 : f32 to vector<1x128xf32>
    %310 = arith.select %306, %309, %183 : vector<1x128xi1>, vector<1x128xf32>
    %311 = arith.cmpf oeq, %205, %253 : vector<1x128xf32>
    %cst_106 = arith.constant dense<true> : vector<1x128xi1>
    %312 = arith.xori %307, %cst_106 : vector<1x128xi1>
    %313 = arith.andi %311, %312 : vector<1x128xi1>
    %314 = arith.ori %307, %313 : vector<1x128xi1>
    %315 = arith.select %313, %212, %243 : vector<1x128xi1>, vector<1x128xf32>
    %cst_107 = arith.constant -1.000000e+30 : f32
    %316 = vector.broadcast %cst_107 : f32 to vector<1x128xf32>
    %317 = arith.select %313, %316, %205 : vector<1x128xi1>, vector<1x128xf32>
    %318 = arith.cmpf oeq, %227, %253 : vector<1x128xf32>
    %cst_108 = arith.constant dense<true> : vector<1x128xi1>
    %319 = arith.xori %314, %cst_108 : vector<1x128xi1>
    %320 = arith.andi %318, %319 : vector<1x128xi1>
    %321 = arith.select %320, %234, %244 : vector<1x128xi1>, vector<1x128xf32>
    %cst_109 = arith.constant -1.000000e+30 : f32
    %322 = vector.broadcast %cst_109 : f32 to vector<1x128xf32>
    %323 = arith.select %320, %322, %227 : vector<1x128xi1>, vector<1x128xf32>
    %324 = arith.maximumf %261, %268 : vector<1x128xf32>
    %325 = arith.maximumf %324, %275 : vector<1x128xf32>
    %326 = arith.maximumf %325, %282 : vector<1x128xf32>
    %327 = arith.maximumf %326, %289 : vector<1x128xf32>
    %328 = arith.maximumf %327, %296 : vector<1x128xf32>
    %329 = arith.maximumf %328, %303 : vector<1x128xf32>
    %330 = arith.maximumf %329, %310 : vector<1x128xf32>
    %331 = arith.maximumf %330, %317 : vector<1x128xf32>
    %332 = arith.maximumf %331, %323 : vector<1x128xf32>
    %false_110 = arith.constant false
    %333 = vector.broadcast %false_110 : i1 to vector<1x128xi1>
    %334 = arith.cmpf oeq, %261, %332 : vector<1x128xf32>
    %cst_111 = arith.constant dense<true> : vector<1x128xi1>
    %335 = arith.xori %333, %cst_111 : vector<1x128xi1>
    %336 = arith.andi %334, %335 : vector<1x128xi1>
    %337 = arith.ori %333, %336 : vector<1x128xi1>
    %338 = arith.select %336, %36, %259 : vector<1x128xi1>, vector<1x128xf32>
    %cst_112 = arith.constant -1.000000e+30 : f32
    %339 = vector.broadcast %cst_112 : f32 to vector<1x128xf32>
    %340 = arith.select %336, %339, %261 : vector<1x128xi1>, vector<1x128xf32>
    %341 = arith.cmpf oeq, %268, %332 : vector<1x128xf32>
    %cst_113 = arith.constant dense<true> : vector<1x128xi1>
    %342 = arith.xori %337, %cst_113 : vector<1x128xi1>
    %343 = arith.andi %341, %342 : vector<1x128xi1>
    %344 = arith.ori %337, %343 : vector<1x128xi1>
    %345 = arith.select %343, %58, %266 : vector<1x128xi1>, vector<1x128xf32>
    %cst_114 = arith.constant -1.000000e+30 : f32
    %346 = vector.broadcast %cst_114 : f32 to vector<1x128xf32>
    %347 = arith.select %343, %346, %268 : vector<1x128xi1>, vector<1x128xf32>
    %348 = arith.cmpf oeq, %275, %332 : vector<1x128xf32>
    %cst_115 = arith.constant dense<true> : vector<1x128xi1>
    %349 = arith.xori %344, %cst_115 : vector<1x128xi1>
    %350 = arith.andi %348, %349 : vector<1x128xi1>
    %351 = arith.ori %344, %350 : vector<1x128xi1>
    %352 = arith.select %350, %80, %273 : vector<1x128xi1>, vector<1x128xf32>
    %cst_116 = arith.constant -1.000000e+30 : f32
    %353 = vector.broadcast %cst_116 : f32 to vector<1x128xf32>
    %354 = arith.select %350, %353, %275 : vector<1x128xi1>, vector<1x128xf32>
    %355 = arith.cmpf oeq, %282, %332 : vector<1x128xf32>
    %cst_117 = arith.constant dense<true> : vector<1x128xi1>
    %356 = arith.xori %351, %cst_117 : vector<1x128xi1>
    %357 = arith.andi %355, %356 : vector<1x128xi1>
    %358 = arith.ori %351, %357 : vector<1x128xi1>
    %359 = arith.select %357, %102, %280 : vector<1x128xi1>, vector<1x128xf32>
    %cst_118 = arith.constant -1.000000e+30 : f32
    %360 = vector.broadcast %cst_118 : f32 to vector<1x128xf32>
    %361 = arith.select %357, %360, %282 : vector<1x128xi1>, vector<1x128xf32>
    %362 = arith.cmpf oeq, %289, %332 : vector<1x128xf32>
    %cst_119 = arith.constant dense<true> : vector<1x128xi1>
    %363 = arith.xori %358, %cst_119 : vector<1x128xi1>
    %364 = arith.andi %362, %363 : vector<1x128xi1>
    %365 = arith.ori %358, %364 : vector<1x128xi1>
    %366 = arith.select %364, %124, %287 : vector<1x128xi1>, vector<1x128xf32>
    %cst_120 = arith.constant -1.000000e+30 : f32
    %367 = vector.broadcast %cst_120 : f32 to vector<1x128xf32>
    %368 = arith.select %364, %367, %289 : vector<1x128xi1>, vector<1x128xf32>
    %369 = arith.cmpf oeq, %296, %332 : vector<1x128xf32>
    %cst_121 = arith.constant dense<true> : vector<1x128xi1>
    %370 = arith.xori %365, %cst_121 : vector<1x128xi1>
    %371 = arith.andi %369, %370 : vector<1x128xi1>
    %372 = arith.ori %365, %371 : vector<1x128xi1>
    %373 = arith.select %371, %146, %294 : vector<1x128xi1>, vector<1x128xf32>
    %cst_122 = arith.constant -1.000000e+30 : f32
    %374 = vector.broadcast %cst_122 : f32 to vector<1x128xf32>
    %375 = arith.select %371, %374, %296 : vector<1x128xi1>, vector<1x128xf32>
    %376 = arith.cmpf oeq, %303, %332 : vector<1x128xf32>
    %cst_123 = arith.constant dense<true> : vector<1x128xi1>
    %377 = arith.xori %372, %cst_123 : vector<1x128xi1>
    %378 = arith.andi %376, %377 : vector<1x128xi1>
    %379 = arith.ori %372, %378 : vector<1x128xi1>
    %380 = arith.select %378, %168, %301 : vector<1x128xi1>, vector<1x128xf32>
    %cst_124 = arith.constant -1.000000e+30 : f32
    %381 = vector.broadcast %cst_124 : f32 to vector<1x128xf32>
    %382 = arith.select %378, %381, %303 : vector<1x128xi1>, vector<1x128xf32>
    %383 = arith.cmpf oeq, %310, %332 : vector<1x128xf32>
    %cst_125 = arith.constant dense<true> : vector<1x128xi1>
    %384 = arith.xori %379, %cst_125 : vector<1x128xi1>
    %385 = arith.andi %383, %384 : vector<1x128xi1>
    %386 = arith.ori %379, %385 : vector<1x128xi1>
    %387 = arith.select %385, %190, %308 : vector<1x128xi1>, vector<1x128xf32>
    %cst_126 = arith.constant -1.000000e+30 : f32
    %388 = vector.broadcast %cst_126 : f32 to vector<1x128xf32>
    %389 = arith.select %385, %388, %310 : vector<1x128xi1>, vector<1x128xf32>
    %390 = arith.cmpf oeq, %317, %332 : vector<1x128xf32>
    %cst_127 = arith.constant dense<true> : vector<1x128xi1>
    %391 = arith.xori %386, %cst_127 : vector<1x128xi1>
    %392 = arith.andi %390, %391 : vector<1x128xi1>
    %393 = arith.ori %386, %392 : vector<1x128xi1>
    %394 = arith.select %392, %212, %315 : vector<1x128xi1>, vector<1x128xf32>
    %cst_128 = arith.constant -1.000000e+30 : f32
    %395 = vector.broadcast %cst_128 : f32 to vector<1x128xf32>
    %396 = arith.select %392, %395, %317 : vector<1x128xi1>, vector<1x128xf32>
    %397 = arith.cmpf oeq, %323, %332 : vector<1x128xf32>
    %cst_129 = arith.constant dense<true> : vector<1x128xi1>
    %398 = arith.xori %393, %cst_129 : vector<1x128xi1>
    %399 = arith.andi %397, %398 : vector<1x128xi1>
    %400 = arith.select %399, %234, %321 : vector<1x128xi1>, vector<1x128xf32>
    %cst_130 = arith.constant -1.000000e+30 : f32
    %401 = vector.broadcast %cst_130 : f32 to vector<1x128xf32>
    %402 = arith.select %399, %401, %323 : vector<1x128xi1>, vector<1x128xf32>
    %403 = arith.maximumf %340, %347 : vector<1x128xf32>
    %404 = arith.maximumf %403, %354 : vector<1x128xf32>
    %405 = arith.maximumf %404, %361 : vector<1x128xf32>
    %406 = arith.maximumf %405, %368 : vector<1x128xf32>
    %407 = arith.maximumf %406, %375 : vector<1x128xf32>
    %408 = arith.maximumf %407, %382 : vector<1x128xf32>
    %409 = arith.maximumf %408, %389 : vector<1x128xf32>
    %410 = arith.maximumf %409, %396 : vector<1x128xf32>
    %411 = arith.maximumf %410, %402 : vector<1x128xf32>
    %false_131 = arith.constant false
    %412 = vector.broadcast %false_131 : i1 to vector<1x128xi1>
    %413 = arith.cmpf oeq, %340, %411 : vector<1x128xf32>
    %cst_132 = arith.constant dense<true> : vector<1x128xi1>
    %414 = arith.xori %412, %cst_132 : vector<1x128xi1>
    %415 = arith.andi %413, %414 : vector<1x128xi1>
    %416 = arith.ori %412, %415 : vector<1x128xi1>
    %417 = arith.select %415, %36, %338 : vector<1x128xi1>, vector<1x128xf32>
    %cst_133 = arith.constant -1.000000e+30 : f32
    %418 = vector.broadcast %cst_133 : f32 to vector<1x128xf32>
    %419 = arith.select %415, %418, %340 : vector<1x128xi1>, vector<1x128xf32>
    %420 = arith.cmpf oeq, %347, %411 : vector<1x128xf32>
    %cst_134 = arith.constant dense<true> : vector<1x128xi1>
    %421 = arith.xori %416, %cst_134 : vector<1x128xi1>
    %422 = arith.andi %420, %421 : vector<1x128xi1>
    %423 = arith.ori %416, %422 : vector<1x128xi1>
    %424 = arith.select %422, %58, %345 : vector<1x128xi1>, vector<1x128xf32>
    %cst_135 = arith.constant -1.000000e+30 : f32
    %425 = vector.broadcast %cst_135 : f32 to vector<1x128xf32>
    %426 = arith.select %422, %425, %347 : vector<1x128xi1>, vector<1x128xf32>
    %427 = arith.cmpf oeq, %354, %411 : vector<1x128xf32>
    %cst_136 = arith.constant dense<true> : vector<1x128xi1>
    %428 = arith.xori %423, %cst_136 : vector<1x128xi1>
    %429 = arith.andi %427, %428 : vector<1x128xi1>
    %430 = arith.ori %423, %429 : vector<1x128xi1>
    %431 = arith.select %429, %80, %352 : vector<1x128xi1>, vector<1x128xf32>
    %cst_137 = arith.constant -1.000000e+30 : f32
    %432 = vector.broadcast %cst_137 : f32 to vector<1x128xf32>
    %433 = arith.select %429, %432, %354 : vector<1x128xi1>, vector<1x128xf32>
    %434 = arith.cmpf oeq, %361, %411 : vector<1x128xf32>
    %cst_138 = arith.constant dense<true> : vector<1x128xi1>
    %435 = arith.xori %430, %cst_138 : vector<1x128xi1>
    %436 = arith.andi %434, %435 : vector<1x128xi1>
    %437 = arith.ori %430, %436 : vector<1x128xi1>
    %438 = arith.select %436, %102, %359 : vector<1x128xi1>, vector<1x128xf32>
    %cst_139 = arith.constant -1.000000e+30 : f32
    %439 = vector.broadcast %cst_139 : f32 to vector<1x128xf32>
    %440 = arith.select %436, %439, %361 : vector<1x128xi1>, vector<1x128xf32>
    %441 = arith.cmpf oeq, %368, %411 : vector<1x128xf32>
    %cst_140 = arith.constant dense<true> : vector<1x128xi1>
    %442 = arith.xori %437, %cst_140 : vector<1x128xi1>
    %443 = arith.andi %441, %442 : vector<1x128xi1>
    %444 = arith.ori %437, %443 : vector<1x128xi1>
    %445 = arith.select %443, %124, %366 : vector<1x128xi1>, vector<1x128xf32>
    %cst_141 = arith.constant -1.000000e+30 : f32
    %446 = vector.broadcast %cst_141 : f32 to vector<1x128xf32>
    %447 = arith.select %443, %446, %368 : vector<1x128xi1>, vector<1x128xf32>
    %448 = arith.cmpf oeq, %375, %411 : vector<1x128xf32>
    %cst_142 = arith.constant dense<true> : vector<1x128xi1>
    %449 = arith.xori %444, %cst_142 : vector<1x128xi1>
    %450 = arith.andi %448, %449 : vector<1x128xi1>
    %451 = arith.ori %444, %450 : vector<1x128xi1>
    %452 = arith.select %450, %146, %373 : vector<1x128xi1>, vector<1x128xf32>
    %cst_143 = arith.constant -1.000000e+30 : f32
    %453 = vector.broadcast %cst_143 : f32 to vector<1x128xf32>
    %454 = arith.select %450, %453, %375 : vector<1x128xi1>, vector<1x128xf32>
    %455 = arith.cmpf oeq, %382, %411 : vector<1x128xf32>
    %cst_144 = arith.constant dense<true> : vector<1x128xi1>
    %456 = arith.xori %451, %cst_144 : vector<1x128xi1>
    %457 = arith.andi %455, %456 : vector<1x128xi1>
    %458 = arith.ori %451, %457 : vector<1x128xi1>
    %459 = arith.select %457, %168, %380 : vector<1x128xi1>, vector<1x128xf32>
    %cst_145 = arith.constant -1.000000e+30 : f32
    %460 = vector.broadcast %cst_145 : f32 to vector<1x128xf32>
    %461 = arith.select %457, %460, %382 : vector<1x128xi1>, vector<1x128xf32>
    %462 = arith.cmpf oeq, %389, %411 : vector<1x128xf32>
    %cst_146 = arith.constant dense<true> : vector<1x128xi1>
    %463 = arith.xori %458, %cst_146 : vector<1x128xi1>
    %464 = arith.andi %462, %463 : vector<1x128xi1>
    %465 = arith.ori %458, %464 : vector<1x128xi1>
    %466 = arith.select %464, %190, %387 : vector<1x128xi1>, vector<1x128xf32>
    %cst_147 = arith.constant -1.000000e+30 : f32
    %467 = vector.broadcast %cst_147 : f32 to vector<1x128xf32>
    %468 = arith.select %464, %467, %389 : vector<1x128xi1>, vector<1x128xf32>
    %469 = arith.cmpf oeq, %396, %411 : vector<1x128xf32>
    %cst_148 = arith.constant dense<true> : vector<1x128xi1>
    %470 = arith.xori %465, %cst_148 : vector<1x128xi1>
    %471 = arith.andi %469, %470 : vector<1x128xi1>
    %472 = arith.ori %465, %471 : vector<1x128xi1>
    %473 = arith.select %471, %212, %394 : vector<1x128xi1>, vector<1x128xf32>
    %cst_149 = arith.constant -1.000000e+30 : f32
    %474 = vector.broadcast %cst_149 : f32 to vector<1x128xf32>
    %475 = arith.select %471, %474, %396 : vector<1x128xi1>, vector<1x128xf32>
    %476 = arith.cmpf oeq, %402, %411 : vector<1x128xf32>
    %cst_150 = arith.constant dense<true> : vector<1x128xi1>
    %477 = arith.xori %472, %cst_150 : vector<1x128xi1>
    %478 = arith.andi %476, %477 : vector<1x128xi1>
    %479 = arith.select %478, %234, %400 : vector<1x128xi1>, vector<1x128xf32>
    %cst_151 = arith.constant -1.000000e+30 : f32
    %480 = vector.broadcast %cst_151 : f32 to vector<1x128xf32>
    %481 = arith.select %478, %480, %402 : vector<1x128xi1>, vector<1x128xf32>
    %482 = arith.maximumf %419, %426 : vector<1x128xf32>
    %483 = arith.maximumf %482, %433 : vector<1x128xf32>
    %484 = arith.maximumf %483, %440 : vector<1x128xf32>
    %485 = arith.maximumf %484, %447 : vector<1x128xf32>
    %486 = arith.maximumf %485, %454 : vector<1x128xf32>
    %487 = arith.maximumf %486, %461 : vector<1x128xf32>
    %488 = arith.maximumf %487, %468 : vector<1x128xf32>
    %489 = arith.maximumf %488, %475 : vector<1x128xf32>
    %490 = arith.maximumf %489, %481 : vector<1x128xf32>
    %false_152 = arith.constant false
    %491 = vector.broadcast %false_152 : i1 to vector<1x128xi1>
    %492 = arith.cmpf oeq, %419, %490 : vector<1x128xf32>
    %cst_153 = arith.constant dense<true> : vector<1x128xi1>
    %493 = arith.xori %491, %cst_153 : vector<1x128xi1>
    %494 = arith.andi %492, %493 : vector<1x128xi1>
    %495 = arith.ori %491, %494 : vector<1x128xi1>
    %496 = arith.select %494, %36, %417 : vector<1x128xi1>, vector<1x128xf32>
    %497 = arith.cmpf oeq, %426, %490 : vector<1x128xf32>
    %cst_154 = arith.constant dense<true> : vector<1x128xi1>
    %498 = arith.xori %495, %cst_154 : vector<1x128xi1>
    %499 = arith.andi %497, %498 : vector<1x128xi1>
    %500 = arith.ori %495, %499 : vector<1x128xi1>
    %501 = arith.select %499, %58, %424 : vector<1x128xi1>, vector<1x128xf32>
    %502 = arith.cmpf oeq, %433, %490 : vector<1x128xf32>
    %cst_155 = arith.constant dense<true> : vector<1x128xi1>
    %503 = arith.xori %500, %cst_155 : vector<1x128xi1>
    %504 = arith.andi %502, %503 : vector<1x128xi1>
    %505 = arith.ori %500, %504 : vector<1x128xi1>
    %506 = arith.select %504, %80, %431 : vector<1x128xi1>, vector<1x128xf32>
    %507 = arith.cmpf oeq, %440, %490 : vector<1x128xf32>
    %cst_156 = arith.constant dense<true> : vector<1x128xi1>
    %508 = arith.xori %505, %cst_156 : vector<1x128xi1>
    %509 = arith.andi %507, %508 : vector<1x128xi1>
    %510 = arith.ori %505, %509 : vector<1x128xi1>
    %511 = arith.select %509, %102, %438 : vector<1x128xi1>, vector<1x128xf32>
    %512 = arith.cmpf oeq, %447, %490 : vector<1x128xf32>
    %cst_157 = arith.constant dense<true> : vector<1x128xi1>
    %513 = arith.xori %510, %cst_157 : vector<1x128xi1>
    %514 = arith.andi %512, %513 : vector<1x128xi1>
    %515 = arith.ori %510, %514 : vector<1x128xi1>
    %516 = arith.select %514, %124, %445 : vector<1x128xi1>, vector<1x128xf32>
    %517 = arith.cmpf oeq, %454, %490 : vector<1x128xf32>
    %cst_158 = arith.constant dense<true> : vector<1x128xi1>
    %518 = arith.xori %515, %cst_158 : vector<1x128xi1>
    %519 = arith.andi %517, %518 : vector<1x128xi1>
    %520 = arith.ori %515, %519 : vector<1x128xi1>
    %521 = arith.select %519, %146, %452 : vector<1x128xi1>, vector<1x128xf32>
    %522 = arith.cmpf oeq, %461, %490 : vector<1x128xf32>
    %cst_159 = arith.constant dense<true> : vector<1x128xi1>
    %523 = arith.xori %520, %cst_159 : vector<1x128xi1>
    %524 = arith.andi %522, %523 : vector<1x128xi1>
    %525 = arith.ori %520, %524 : vector<1x128xi1>
    %526 = arith.select %524, %168, %459 : vector<1x128xi1>, vector<1x128xf32>
    %527 = arith.cmpf oeq, %468, %490 : vector<1x128xf32>
    %cst_160 = arith.constant dense<true> : vector<1x128xi1>
    %528 = arith.xori %525, %cst_160 : vector<1x128xi1>
    %529 = arith.andi %527, %528 : vector<1x128xi1>
    %530 = arith.ori %525, %529 : vector<1x128xi1>
    %531 = arith.select %529, %190, %466 : vector<1x128xi1>, vector<1x128xf32>
    %532 = arith.cmpf oeq, %475, %490 : vector<1x128xf32>
    %cst_161 = arith.constant dense<true> : vector<1x128xi1>
    %533 = arith.xori %530, %cst_161 : vector<1x128xi1>
    %534 = arith.andi %532, %533 : vector<1x128xi1>
    %535 = arith.ori %530, %534 : vector<1x128xi1>
    %536 = arith.select %534, %212, %473 : vector<1x128xi1>, vector<1x128xf32>
    %537 = arith.cmpf oeq, %481, %490 : vector<1x128xf32>
    %cst_162 = arith.constant dense<true> : vector<1x128xi1>
    %538 = arith.xori %535, %cst_162 : vector<1x128xi1>
    %539 = arith.andi %537, %538 : vector<1x128xi1>
    %540 = arith.select %539, %234, %479 : vector<1x128xi1>, vector<1x128xf32>
    %cst_163 = arith.constant 0.000000e+00 : f32
    %541 = vector.broadcast %cst_163 : f32 to vector<16x128xf32>
    %542 = vector.broadcast %496 : vector<1x128xf32> to vector<16x128xf32>
    %543 = arith.mulf %21, %542 : vector<16x128xf32>
    %544 = arith.addf %541, %543 : vector<16x128xf32>
    %545 = vector.broadcast %501 : vector<1x128xf32> to vector<16x128xf32>
    %546 = arith.mulf %43, %545 : vector<16x128xf32>
    %547 = arith.addf %544, %546 : vector<16x128xf32>
    %548 = vector.broadcast %506 : vector<1x128xf32> to vector<16x128xf32>
    %549 = arith.mulf %65, %548 : vector<16x128xf32>
    %550 = arith.addf %547, %549 : vector<16x128xf32>
    %551 = vector.broadcast %511 : vector<1x128xf32> to vector<16x128xf32>
    %552 = arith.mulf %87, %551 : vector<16x128xf32>
    %553 = arith.addf %550, %552 : vector<16x128xf32>
    %554 = vector.broadcast %516 : vector<1x128xf32> to vector<16x128xf32>
    %555 = arith.mulf %109, %554 : vector<16x128xf32>
    %556 = arith.addf %553, %555 : vector<16x128xf32>
    %557 = vector.broadcast %521 : vector<1x128xf32> to vector<16x128xf32>
    %558 = arith.mulf %131, %557 : vector<16x128xf32>
    %559 = arith.addf %556, %558 : vector<16x128xf32>
    %560 = vector.broadcast %526 : vector<1x128xf32> to vector<16x128xf32>
    %561 = arith.mulf %153, %560 : vector<16x128xf32>
    %562 = arith.addf %559, %561 : vector<16x128xf32>
    %563 = vector.broadcast %531 : vector<1x128xf32> to vector<16x128xf32>
    %564 = arith.mulf %175, %563 : vector<16x128xf32>
    %565 = arith.addf %562, %564 : vector<16x128xf32>
    %566 = vector.broadcast %536 : vector<1x128xf32> to vector<16x128xf32>
    %567 = arith.mulf %197, %566 : vector<16x128xf32>
    %568 = arith.addf %565, %567 : vector<16x128xf32>
    %569 = vector.broadcast %540 : vector<1x128xf32> to vector<16x128xf32>
    %570 = arith.mulf %219, %569 : vector<16x128xf32>
    %571 = arith.addf %568, %570 : vector<16x128xf32>
    %572 = arith.addf %3, %571 : vector<16x128xf32>
    %c0_164 = arith.constant 0 : index
    %c0_165 = arith.constant 0 : index
    %c0_166 = arith.constant 0 : index
    %573 = vector.load %arg7[%c0_164, %c0_165, %c0_166] : memref<1x16x128xf32, #tpu.memory_space<vmem>>, vector<1x16x128xf32>
    %574 = vector.shape_cast %573 : vector<1x16x128xf32> to vector<16x128xf32>
    %575 = vector.shape_cast %572 : vector<16x128xf32> to vector<1x16x128xf32>
    tpu.vector_store %arg7[%c0_164, %c0_165, %c0_166], %575 {strides = array<i32>} : memref<1x16x128xf32, #tpu.memory_space<vmem>>, vector<1x16x128xf32>,
    return
  }
  func.func @transform_0(%arg0: i32, %arg1: i32) -> (i32, i32, i32) {
    %c0_i32 = arith.constant 0 : i32
    %c0_i32_0 = arith.constant 0 : i32
    %c0_i32_1 = arith.constant 0 : i32
    return %arg0, %c0_i32, %c0_i32_0 : i32, i32, i32
  }
  func.func @transform_1(%arg0: i32, %arg1: i32) -> (i32, i32, i32) {
    %c0_i32 = arith.constant 0 : i32
    %c0_i32_0 = arith.constant 0 : i32
    return %arg0, %c0_i32, %arg1 : i32, i32, i32
  }
  func.func @transform_2(%arg0: i32, %arg1: i32) -> (i32, i32, i32, i32) {
    %c0_i32 = arith.constant 0 : i32
    %c0_i32_0 = arith.constant 0 : i32
    %c0_i32_1 = arith.constant 0 : i32
    return %arg0, %arg1, %c0_i32, %c0_i32_0 : i32, i32, i32, i32
  }
  func.func @transform_3(%arg0: i32, %arg1: i32) -> (i32, i32) {
    %c0_i32 = arith.constant 0 : i32
    %c0_i32_0 = arith.constant 0 : i32
    %c0_i32_1 = arith.constant 0 : i32
    return %c0_i32, %c0_i32_0 : i32, i32
  }
  func.func @transform_4(%arg0: i32, %arg1: i32) -> i32 {
    %c0_i32 = arith.constant 0 : i32
    %c0_i32_0 = arith.constant 0 : i32
    return %c0_i32 : i32
  }
  func.func @transform_5(%arg0: i32, %arg1: i32) -> (i32, i32, i32) {
    %c0_i32 = arith.constant 0 : i32
    %c0_i32_0 = arith.constant 0 : i32
    return %arg0, %c0_i32, %arg1 : i32, i32, i32
  }
}

</mosaic_0001>

<llo_original>
// kernel: tpu_custom_call.1
$region0: #{tpu_custom_call.1}
  #allocation0 [shape = 'u32[]', space=smem, size = 0x4, offset = 0x4, fixed_abs, tag = 'smem constant byte address 0x4 - core index']
  #allocation1 [shape = 'u32[72,128]{1,0:T(1,128)}', space=vmem, size = 0x9000, scoped, tag = 'internal scratch']
  %s0 = inlined_call_operand.vmem [shape: f32[2,16,128], index: 0, kind: input, shape index: {}]
  %s1 = inlined_call_operand.hbm [shape: f32[2,16,128], index: 1, kind: input, shape index: {}]
  %s2 = inlined_call_operand.vmem [shape: s32[2,1,10,128], index: 2, kind: input, shape index: {}]
  %s3 = inlined_call_operand.vmem [shape: f32[4,16], index: 3, kind: input, shape index: {}]
  %s4 = inlined_call_operand.vmem [shape: f32[2], index: 4, kind: input, shape index: {}]
  %s5 = inlined_call_operand.hbm [shape: f32[2,16,128], index: 5, kind: output, shape index: {}]
  %s6 = sld [smem:[#allocation0]]
  $region61: #{tpu_custom_call.1} parent=0
    _
  %s8 = ssub.s32 1, %s6
  %s9 = scalar_select 0, %s8, %s6
  $region1: #{tpu_custom_call.1} parent=0
    #allocation2 [shape = 'u8[16384]{0}', space=vmem, size = 0x4000, scoped, tag = 'input window, operand 1']
    #allocation3 [shape = 's32[2]{0}', space=sflag, size = 0x8, scoped, tag = 'scoped memory for tpu_custom_call.1']
    #allocation4 [shape = 's32[2]{0}', space=sflag, size = 0x8, scoped, tag = 'scoped memory for tpu_custom_call.1']
    #allocation5 [shape = 's32[2]{0}', space=sflag, size = 0x8, scoped, tag = 'scoped memory for tpu_custom_call.1']
    #allocation6 [shape = 'u8[512]{0}', space=smem, size = 0x200, scoped, tag = 'input window, operand 4, single buffered']
    #allocation7 [shape = 'u8[16384]{0}', space=vmem, size = 0x4000, scoped, tag = 'output window, operand 0']
    %10 = vsyncpa [#allocation3], 0
    %s11 = scalar_lea.sflag [#allocation3], 1
    %12 = vsyncpa %s11, 0
    %13 = vsyncpa [#allocation5], 0
    %14 = vsyncpa [#allocation4], 0
    %s15 = scalar_lea.sflag [#allocation4], 1
    %16 = vsyncpa %s15, 0
    loop: start=0, step=1, limit=4
    $region2: #{tpu_custom_call.1} parent=1 // loop_pre_header
      _
    $region3: #{tpu_custom_call.1} parent=1 // loop_header
      %s18 = sphi 0, %s22
      %p19 = scmp.ge.s32.totalorder %s18, 4
      %s25 = sphi 0, %s37
      %s26 = sphi 0, %s33
      %s27 = sphi 0, %s25
      %s28 = sphi 0, %s26
      %s29 = sphi 0, %s27
      %s30 = sphi 0, %s28
      %s40 = sphi 0, %s42
      %s43 = sphi 0, %s40
      %s44 = sphi 0, %s43
      %s60 = sphi 0, %s44
      %s68 = sphi 0, %s70
      %s71 = sphi 0, %s68
      %s72 = sphi 0, %s71
      %s88 = sphi 0, %s72
      %s96 = sphi 0, %s98
      %s99 = sphi 0, %s96
      %s100 = sphi 0, %s99
      %s116 = sphi 0, %s100
      %s120 = sphi 0, %s120
      %s122 = sphi 0, %s120
      %s123 = sphi 0, %s122
      %s137 = sphi 0, %s123
      %s141 = sphi 0, %s141
      %s143 = sphi 0, %s141
      %s144 = sphi 0, %s143
      %s158 = sphi 0, %s144
      %s166 = sphi 0, %s168
      %s169 = sphi 0, %s166
      %s170 = sphi 0, %s169
      %s186 = sphi 0, %s170
    $region4: #{tpu_custom_call.1} parent=1 // loop_header_branch
      %21 = sbr.rel (%p19) target = $region8
    $region5: #{tpu_custom_call.1} parent=1 // loop_body
      %s23 = ssub.s32 %s18, 1
      %s24 = ssub.s32 %s18, 2
      %s31 = sadd.s32 1, %s26
      %p32 = scmp.ge.s32.totalorder %s31, 1
      %s33 = scalar_select %p32, 0, %s31
      %s34 = sadd.s32 1, %s25
      %s35 = scalar_select %p32, %s34, %s25
      %p36 = scmp.ge.s32.totalorder %s35, 2
      %s37 = scalar_select %p36, 0, %s35
      %s38 = ssub.s32 %s25, %s37
      %p39 = scmp.eq.s32.totalorder %s38, 0
      %s41 = sadd.s32 %s40, 1
      %s42 = scalar_select %p39, %s40, %s41
      %p45 = pneg %p39
      %p46 = scmp.eq.s32.totalorder %s18, 1
      %p47 = por %p45, %p46
      %p48 = scmp.ne.s32.totalorder %s40, %s43
      %p49 = scmp.eq.s32.totalorder %s18, 0
      %p50 = por %p48, %p49
      %p51 = scmp.ne.s32.totalorder %s40, %s43
      %p52 = scmp.eq.s32.totalorder %s23, 1
      %p53 = por %p51, %p52
      %p54 = scmp.ne.s32.totalorder %s43, %s44
      %p55 = scmp.eq.s32.totalorder %s23, 0
      %p56 = por %p54, %p55
      %p57 = scmp.ne.s32.totalorder %s43, %s44
      %p58 = scmp.eq.s32.totalorder %s24, 1
      %p59 = por %p57, %p58
      %p61 = scmp.ne.s32.totalorder %s44, %s60
      %p62 = scmp.eq.s32.totalorder %s24, 0
      %p63 = por %p61, %p62
      %s64 = ssub.s32 %s25, %s37
      %s65 = ssub.s32 %s26, %s33
      %s66 = sor.u32 %s64, %s65
      %p67 = scmp.eq.s32.totalorder %s66, 0
      %s69 = sadd.s32 %s68, 1
      %s70 = scalar_select %p67, %s68, %s69
      %p73 = pneg %p67
      %p74 = scmp.eq.s32.totalorder %s18, 1
      %p75 = por %p73, %p74
      %p76 = scmp.ne.s32.totalorder %s68, %s71
      %p77 = scmp.eq.s32.totalorder %s18, 0
      %p78 = por %p76, %p77
      %p79 = scmp.ne.s32.totalorder %s68, %s71
      %p80 = scmp.eq.s32.totalorder %s23, 1
      %p81 = por %p79, %p80
      %p82 = scmp.ne.s32.totalorder %s71, %s72
      %p83 = scmp.eq.s32.totalorder %s23, 0
      %p84 = por %p82, %p83
      %p85 = scmp.ne.s32.totalorder %s71, %s72
      %p86 = scmp.eq.s32.totalorder %s24, 1
      %p87 = por %p85, %p86
      %p89 = scmp.ne.s32.totalorder %s72, %s88
      %p90 = scmp.eq.s32.totalorder %s24, 0
      %p91 = por %p89, %p90
      %s92 = ssub.s32 %s25, %s37
      %s93 = ssub.s32 %s26, %s33
      %s94 = sor.u32 %s92, %s93
      %p95 = scmp.eq.s32.totalorder %s94, 0
      %s97 = sadd.s32 %s96, 1
      %s98 = scalar_select %p95, %s96, %s97
      %p101 = pneg %p95
      %p102 = scmp.eq.s32.totalorder %s18, 1
      %p103 = por %p101, %p102
      %p104 = scmp.ne.s32.totalorder %s96, %s99
      %p105 = scmp.eq.s32.totalorder %s18, 0
      %p106 = por %p104, %p105
      %p107 = scmp.ne.s32.totalorder %s96, %s99
      %p108 = scmp.eq.s32.totalorder %s23, 1
      %p109 = por %p107, %p108
      %p110 = scmp.ne.s32.totalorder %s99, %s100
      %p111 = scmp.eq.s32.totalorder %s23, 0
      %p112 = por %p110, %p111
      %p113 = scmp.ne.s32.totalorder %s99, %s100
      %p114 = scmp.eq.s32.totalorder %s24, 1
      %p115 = por %p113, %p114
      %p117 = scmp.ne.s32.totalorder %s100, %s116
      %p118 = scmp.eq.s32.totalorder %s24, 0
      %p119 = por %p117, %p118
      %s121 = sadd.s32 %s120, 1
      %p124 = scmp.eq.s32.totalorder %s18, 1
      %p125 = scmp.ne.s32.totalorder %s120, %s122
      %p126 = scmp.eq.s32.totalorder %s18, 0
      %p127 = por %p125, %p126
      %p128 = scmp.ne.s32.totalorder %s120, %s122
      %p129 = scmp.eq.s32.totalorder %s23, 1
      %p130 = por %p128, %p129
      %p131 = scmp.ne.s32.totalorder %s122, %s123
      %p132 = scmp.eq.s32.totalorder %s23, 0
      %p133 = por %p131, %p132
      %p134 = scmp.ne.s32.totalorder %s122, %s123
      %p135 = scmp.eq.s32.totalorder %s24, 1
      %p136 = por %p134, %p135
      %p138 = scmp.ne.s32.totalorder %s123, %s137
      %p139 = scmp.eq.s32.totalorder %s24, 0
      %p140 = por %p138, %p139
      %s142 = sadd.s32 %s141, 1
      %p145 = scmp.eq.s32.totalorder %s18, 1
      %p146 = scmp.ne.s32.totalorder %s141, %s143
      %p147 = scmp.eq.s32.totalorder %s18, 0
      %p148 = por %p146, %p147
      %p149 = scmp.ne.s32.totalorder %s141, %s143
      %p150 = scmp.eq.s32.totalorder %s23, 1
      %p151 = por %p149, %p150
      %p152 = scmp.ne.s32.totalorder %s143, %s144
      %p153 = scmp.eq.s32.totalorder %s23, 0
      %p154 = por %p152, %p153
      %p155 = scmp.ne.s32.totalorder %s143, %s144
      %p156 = scmp.eq.s32.totalorder %s24, 1
      %p157 = por %p155, %p156
      %p159 = scmp.ne.s32.totalorder %s144, %s158
      %p160 = scmp.eq.s32.totalorder %s24, 0
      %p161 = por %p159, %p160
      %s162 = ssub.s32 %s25, %s37
      %s163 = ssub.s32 %s26, %s33
      %s164 = sor.u32 %s162, %s163
      %p165 = scmp.eq.s32.totalorder %s164, 0
      %s167 = sadd.s32 %s166, 1
      %s168 = scalar_select %p165, %s166, %s167
      %p171 = pneg %p165
      %p172 = scmp.eq.s32.totalorder %s18, 1
      %p173 = por %p171, %p172
      %p174 = scmp.ne.s32.totalorder %s166, %s169
      %p175 = scmp.eq.s32.totalorder %s18, 0
      %p176 = por %p174, %p175
      %p177 = scmp.ne.s32.totalorder %s166, %s169
      %p178 = scmp.eq.s32.totalorder %s23, 1
      %p179 = por %p177, %p178
      %p180 = scmp.ne.s32.totalorder %s169, %s170
      %p181 = scmp.eq.s32.totalorder %s23, 0
      %p182 = por %p180, %p181
      %p183 = scmp.ne.s32.totalorder %s169, %s170
      %p184 = scmp.eq.s32.totalorder %s24, 1
      %p185 = por %p183, %p184
      %p187 = scmp.ne.s32.totalorder %s170, %s186
      %p188 = scmp.eq.s32.totalorder %s24, 0
      %p189 = por %p187, %p188
      %p190 = scmp.le.s32.totalorder 1, %s18
      %p191 = scmp.lt.s32.totalorder %s18, 3
      %p192 = pnand %p190, %p191
      %p193 = pneg %p192
      // Predicated region
      $region9: #{tpu_custom_call.1} parent=5 // pred_check
        _
      $region10: #{tpu_custom_call.1} parent=5 // pred_check_branch
        %195 = sbr.rel (%p192) target = $region12
      $region11: #{tpu_custom_call.1} parent=5 // pred_region
        %s196 = ssub.s32 %s18, 1
        // Predicated region
        $region13: #{tpu_custom_call.1} parent=11 // pred_check
          %p197 = pneg %p133
        $region14: #{tpu_custom_call.1} parent=11 // pred_check_branch
          %199 = sbr.rel (%p197) target = $region16
        $region15: #{tpu_custom_call.1} parent=11 // pred_region
          _
        $region16: #{tpu_custom_call.1} parent=11 // pred_fallthru
          _
        // Predicated region
        $region17: #{tpu_custom_call.1} parent=11 // pred_check
          %p200 = pneg %p154
        $region18: #{tpu_custom_call.1} parent=11 // pred_check_branch
          %202 = sbr.rel (%p200) target = $region20
        $region19: #{tpu_custom_call.1} parent=11 // pred_region
          %204 = vsyncadd [#allocation5], 0
          %s206 = sshll.u32 %s4, 4
          %s207 = int_to_ptr.vmem [resolvable:$true] %s206
          %209 = dma.vmem_to_smem %s207, 16, [#allocation6], [#allocation5]
        $region20: #{tpu_custom_call.1} parent=11 // pred_fallthru
          _
      $region12: #{tpu_custom_call.1} parent=5 // pred_fallthru
        _
      %p210 = scmp.lt.s32.totalorder %s18, 2
      // Predicated region
      $region21: #{tpu_custom_call.1} parent=5 // pred_check
        %p211 = pneg %p210
      $region22: #{tpu_custom_call.1} parent=5 // pred_check_branch
        %213 = sbr.rel (%p211) target = $region24
      $region23: #{tpu_custom_call.1} parent=5 // pred_region
        // Predicated region
        $region25: #{tpu_custom_call.1} parent=23 // pred_check
          %p214 = pneg %p50
        $region26: #{tpu_custom_call.1} parent=23 // pred_check_branch
          %216 = sbr.rel (%p214) target = $region28
        $region27: #{tpu_custom_call.1} parent=23 // pred_region
          %p217 = scmp.lt.s32.totalorder %s25, 1
          %s218 = scalar_select %p217, %s25, 1
          %s219 = smul.addr %s218, 2
          %s220 = smul.addr %s219, 8
          %s221 = scalar_lea.vmem %s0, %s220
        $region28: #{tpu_custom_call.1} parent=23 // pred_fallthru
          _
        // Predicated region
        $region29: #{tpu_custom_call.1} parent=23 // pred_check
          %p222 = pneg %p78
        $region30: #{tpu_custom_call.1} parent=23 // pred_check_branch
          %224 = sbr.rel (%p222) target = $region32
        $region31: #{tpu_custom_call.1} parent=23 // pred_region
          %s225 = sand.u32 %s68, 1
          %s226 = scalar_lea.sflag [#allocation3], %s225
          %s227 = sand.u32 %s68, 1
          %s228 = smul.addr %s227, 16
          %s229 = scalar_lea.vmem [#allocation2], %s228
          %231 = vsyncadd %s226, 0
          %s232 = smul.addr %s25, 2
          %s233 = sadd.s32 %s26, %s232
          %s234 = smul.addr %s233, 8
          %s235 = scalar_lea.hbm %s1, %s234
          %s236 = sshll.u32 %s235, 4
          %s237 = int_to_ptr.hbm [resolvable:$true] %s236
          %s238 = sshll.u32 %s229, 4
          %s239 = int_to_ptr.vmem [resolvable:$true] %s238
          %244 = dma.hbm_to_vmem [thread:$0]  %s237, 256, %s239, %s226, 128, 128, 8
        $region32: #{tpu_custom_call.1} parent=23 // pred_fallthru
          _
        // Predicated region
        $region33: #{tpu_custom_call.1} parent=23 // pred_check
          %p245 = pneg %p106
        $region34: #{tpu_custom_call.1} parent=23 // pred_check_branch
          %247 = sbr.rel (%p245) target = $region36
        $region35: #{tpu_custom_call.1} parent=23 // pred_region
          %p248 = scmp.lt.s32.totalorder %s25, 1
          %s249 = scalar_select %p248, %s25, 1
          %p250 = scmp.lt.s32.totalorder %s26, 0
          %s251 = scalar_select %p250, %s26, 0
          %s252 = smul.addr %s251, 2
          %s253 = smul.addr %s249, 2
          %s254 = sadd.s32 %s252, %s253
          %s255 = smul.addr %s254, 8
          %s256 = scalar_lea.vmem %s2, %s255
        $region36: #{tpu_custom_call.1} parent=23 // pred_fallthru
          _
      $region24: #{tpu_custom_call.1} parent=5 // pred_fallthru
        _
      %p257 = scmp.le.s32.totalorder 1, %s18
      %p258 = scmp.lt.s32.totalorder %s18, 3
      %p259 = pnand %p257, %p258
      %p260 = pneg %p259
      // Predicated region
      $region37: #{tpu_custom_call.1} parent=5 // pred_check
        _
      $region38: #{tpu_custom_call.1} parent=5 // pred_check_branch
        %262 = sbr.rel (%p259) target = $region40
      $region39: #{tpu_custom_call.1} parent=5 // pred_region
        %s263 = ssub.s32 %s18, 1
        %s264 = sand.u32 %s71, 1
        %s265 = scalar_lea.sflag [#allocation3], %s264
        %s266 = sand.u32 %s71, 1
        %s267 = smul.addr %s266, 16
        %s268 = scalar_lea.vmem [#allocation2], %s267
        // Predicated region
        $region41: #{tpu_custom_call.1} parent=39 // pred_check
          %p269 = pneg %p84
        $region42: #{tpu_custom_call.1} parent=39 // pred_check_branch
          %271 = sbr.rel (%p269) target = $region44
        $region43: #{tpu_custom_call.1} parent=39 // pred_region
          %273 = dma.done %s265, 256
        $region44: #{tpu_custom_call.1} parent=39 // pred_fallthru
          _
        // Predicated region
        $region45: #{tpu_custom_call.1} parent=39 // pred_check
          %p274 = pneg %p154
        $region46: #{tpu_custom_call.1} parent=39 // pred_check_branch
          %276 = sbr.rel (%p274) target = $region48
        $region47: #{tpu_custom_call.1} parent=39 // pred_region
          %278 = dma.done [#allocation5], 16
        $region48: #{tpu_custom_call.1} parent=39 // pred_fallthru
          _
        %279 = sfence
        %p280 = scmp.lt.s32.totalorder %s27, 1
        %s281 = scalar_select %p280, %s27, 1
        %s282 = smul.addr %s281, 2
        %s283 = smul.addr %s282, 8
        %s284 = scalar_lea.vmem %s0, %s283
        %p285 = pneg %p56
        %p286 = pneg %p53
        %s287 = sand.u32 %s71, 1
        %s288 = scalar_lea.sflag [#allocation3], %s287
        %s289 = sand.u32 %s71, 1
        %s290 = smul.addr %s289, 16
        %s291 = scalar_lea.vmem [#allocation2], %s290
        %p292 = pneg %p84
        %p293 = pneg %p81
        %p294 = scmp.lt.s32.totalorder %s27, 1
        %s295 = scalar_select %p294, %s27, 1
        %p296 = scmp.lt.s32.totalorder %s28, 0
        %s297 = scalar_select %p296, %s28, 0
        %s298 = smul.addr %s297, 2
        %s299 = smul.addr %s295, 2
        %s300 = sadd.s32 %s298, %s299
        %s301 = smul.addr %s300, 8
        %s302 = scalar_lea.vmem %s2, %s301
        %p303 = pneg %p112
        %p304 = pneg %p109
        %p305 = pneg %p133
        %p306 = pneg %p130
        %p307 = pneg %p154
        %p308 = pneg %p151
        %p309 = pneg %p182
        %p310 = pneg %p179
        %s311 = sand.u32 %s169, 1
        %s312 = scalar_lea.sflag [#allocation4], %s311
        %s313 = sand.u32 %s169, 1
        %s314 = smul.addr %s313, 16
        %s315 = scalar_lea.vmem [#allocation7], %s314
        %p316 = scmp.lt.s32.totalorder %s27, 1
        %s317 = scalar_select %p316, %s27, 1
        %s318 = smul.addr %s317, 2
        %s319 = smul.addr %s318, 8
        %s320 = scalar_lea.vmem %s0, %s319
        %p321 = scmp.lt.s32.totalorder %s27, 1
        %s322 = scalar_select %p321, %s27, 1
        %p323 = scmp.lt.s32.totalorder %s28, 0
        %s324 = scalar_select %p323, %s28, 0
        %s325 = smul.addr %s324, 2
        %s326 = smul.addr %s322, 2
        %s327 = sadd.s32 %s325, %s326
        %s328 = smul.addr %s327, 8
        %s329 = scalar_lea.vmem %s2, %s328
        %v330 = vld [vmem:[%s320] sm:$0xff]
        %v331 = vld [vmem:[%s320 + $0x8] sm:$0xff]
        %v332 = vld [vmem:[%s268] sm:$0xff]
        %v333 = vld [vmem:[%s268 + $0x8] sm:$0xff]
        %v334 = vld [vmem:[%s3] sm:$0xf]
        %s335 = sld [smem:[#allocation6]]
        %s336 = sld [smem:[#allocation6 + $0x1]]
        %vm337 = vcmask 130048
        %v339 = vsel %vm337, %v334, 0
        %341 = vmatpush.msra.mxu0 0.0
        %342 = vmatpush.msra.mxu0 0.0
        %343 = vmatpush.msra.mxu0 0.0
        %344 = vmatpush.msra.mxu0 0.0
        %345 = vmatpush.msra.mxu0 0.0
        %346 = vmatpush.msra.mxu0 0.0
        %347 = vmatpush.msra.mxu0 0.0
        %348 = vmatpush.msra.mxu0 0.0
        %349 = vmatpush.msra.mxu0 0.0
        %350 = vmatpush.msra.mxu0 0.0
        %351 = vmatpush.msra.mxu0 0.0
        %352 = vmatpush.msra.mxu0 0.0
        %353 = vmatpush.msra.mxu0 0.0
        %354 = vmatpush.msra.mxu0 0.0
        %355 = vmatpush.msra.mxu0 %v333
        %356 = vmatpush.msra.mxu0 %v332
        %357 = vmatmul.f32.gmra.mxu0 %v339
        %v358 = vpop.f32.mrf.mxu0
        %v359 = vadd.f32 0.0, %v358
        %360 = vdwg.mxu0
        %v361 = vstv %s335
        %v362 = vadd.f32 %v359, %v361
        %v363 = vstv %s336
        %v364 = vadd.f32 %v359, %v363
        %v365 = vlaneseq
        %v366 = vshrl.u32 %v365, 7
        %v367 = vadd.s32 %v366, 8
        %v368 = vadd.s32 %v366, 16
        %v369 = vadd.s32 %v366, 24
        %v370 = vadd.s32 %v366, 32
        %v371 = vadd.s32 %v366, 40
        %v372 = vadd.s32 %v366, 48
        %v373 = vadd.s32 %v366, 56
        %v374 = vadd.s32 %v366, 64
        %v375 = vadd.s32 %v366, 72
        %v376 = vadd.s32 %v366, 80
        %v377 = vadd.s32 %v366, 88
        %v378 = vadd.s32 %v366, 96
        %v379 = vadd.s32 %v366, 104
        %v380 = vadd.s32 %v366, 112
        %v381 = vadd.s32 %v366, 120
        %v382 = vld [vmem:[%s329] sm:$0x1]
        %v383 = vperm.slane %v382, 0
        %vm384 = vcmp.eq.s32.totalorder %v366, %v383
        %vm385 = vcmp.eq.s32.totalorder %v367, %v383
        %vm386 = vcmp.eq.s32.totalorder %v368, %v383
        %vm387 = vcmp.eq.s32.totalorder %v369, %v383
        %vm388 = vcmp.eq.s32.totalorder %v370, %v383
        %vm389 = vcmp.eq.s32.totalorder %v371, %v383
        %vm390 = vcmp.eq.s32.totalorder %v372, %v383
        %vm391 = vcmp.eq.s32.totalorder %v373, %v383
        %vm392 = vcmp.eq.s32.totalorder %v374, %v383
        %vm393 = vcmp.eq.s32.totalorder %v375, %v383
        %vm394 = vcmp.eq.s32.totalorder %v376, %v383
        %vm395 = vcmp.eq.s32.totalorder %v377, %v383
        %vm396 = vcmp.eq.s32.totalorder %v378, %v383
        %vm397 = vcmp.eq.s32.totalorder %v379, %v383
        %vm398 = vcmp.eq.s32.totalorder %v380, %v383
        %vm399 = vcmp.eq.s32.totalorder %v381, %v383
        %v400 = vsel %vm384, 1, 0
        %v401 = vsel %vm385, 1, 0
        %v402 = vsel %vm386, 1, 0
        %v403 = vsel %vm387, 1, 0
        %v404 = vsel %vm388, 1, 0
        %v405 = vsel %vm389, 1, 0
        %v406 = vsel %vm390, 1, 0
        %v407 = vsel %vm391, 1, 0
        %v408 = vsel %vm392, 1, 0
        %v409 = vsel %vm393, 1, 0
        %v410 = vsel %vm394, 1, 0
        %v411 = vsel %vm395, 1, 0
        %v412 = vsel %vm396, 1, 0
        %v413 = vsel %vm397, 1, 0
        %v414 = vsel %vm398, 1, 0
        %v415 = vsel %vm399, 1, 0
        %v416 = vcvt.s32.f32 %v400
        %v417 = vcvt.s32.f32 %v401
        %v418 = vcvt.s32.f32 %v402
        %v419 = vcvt.s32.f32 %v403
        %v420 = vcvt.s32.f32 %v404
        %v421 = vcvt.s32.f32 %v405
        %v422 = vcvt.s32.f32 %v406
        %v423 = vcvt.s32.f32 %v407
        %v424 = vcvt.s32.f32 %v408
        %v425 = vcvt.s32.f32 %v409
        %v426 = vcvt.s32.f32 %v410
        %v427 = vcvt.s32.f32 %v411
        %v428 = vcvt.s32.f32 %v412
        %v429 = vcvt.s32.f32 %v413
        %v430 = vcvt.s32.f32 %v414
        %v431 = vcvt.s32.f32 %v415
        %432 = vmatpush.msra.mxu0 %v431
        %433 = vmatpush.msra.mxu0 %v430
        %434 = vmatpush.msra.mxu0 %v429
        %435 = vmatpush.msra.mxu0 %v428
        %436 = vmatpush.msra.mxu0 %v427
        %437 = vmatpush.msra.mxu0 %v426
        %438 = vmatpush.msra.mxu0 %v425
        %439 = vmatpush.msra.mxu0 %v424
        %440 = vmatpush.msra.mxu0 %v423
        %441 = vmatpush.msra.mxu0 %v422
        %442 = vmatpush.msra.mxu0 %v421
        %443 = vmatpush.msra.mxu0 %v420
        %444 = vmatpush.msra.mxu0 %v419
        %445 = vmatpush.msra.mxu0 %v418
        %446 = vmatpush.msra.mxu0 %v417
        %447 = vmatpush.msra.mxu0 %v416
        %448 = vmatmul.f32.gmra.mxu0 %v330
        %v449 = vpop.f32.mrf.mxu0
        %v450 = vadd.f32 0.0, %v449
        %451 = vmatmul.f32.gmra.mxu0 %v331
        %v452 = vpop.f32.mrf.mxu0
        %v453 = vadd.f32 0.0, %v452
        %454 = vdwg.mxu0
        %455 = vmatpush.msra.mxu0 0.0
        %456 = vmatpush.msra.mxu0 0.0
        %457 = vmatpush.msra.mxu0 0.0
        %458 = vmatpush.msra.mxu0 0.0
        %459 = vmatpush.msra.mxu0 0.0
        %460 = vmatpush.msra.mxu0 0.0
        %461 = vmatpush.msra.mxu0 0.0
        %462 = vmatpush.msra.mxu0 0.0
        %463 = vmatpush.msra.mxu0 0.0
        %464 = vmatpush.msra.mxu0 0.0
        %465 = vmatpush.msra.mxu0 0.0
        %466 = vmatpush.msra.mxu0 0.0
        %467 = vmatpush.msra.mxu0 0.0
        %468 = vmatpush.msra.mxu0 0.0
        %469 = vmatpush.msra.mxu0 %v453
        %470 = vmatpush.msra.mxu0 %v450
        %471 = vmatmul.f32.gmra.mxu0 %v339
        %v472 = vpop.f32.mrf.mxu0
        %v473 = vadd.f32 0.0, %v472
        %474 = vdwg.mxu0
        %v476 = vrot.slane %v362, 7
        %v478 = vadd.f32 %v473, %v476
        %v479 = vxor.u32 %v478, 2147483648
        %v480 = vmul.f32 %v479, 1.442695
        %v481 = vpow.pop %v480
        %v482 = vadd.f32 %v481, 1.0
        %v483 = vrcp.pop %v482
        %v484 = vmul.f32 %v482, %v483
        %v485 = vsub.f32 1.0, %v484
        %v486 = vmul.f32 %v483, %v485
        %v487 = vadd.f32 %v483, %v486
        %vm488 = vweird.f32 %v482
        %vm489 = vweird.f32 %v483
        %vm490 = vmor %vm488, %vm489
        %v491 = vsel %vm490, %v483, %v487
        %v492 = vand.u32 2147483647, %v482
        %vm493 = vcmp.eq.f32.partialorder %v492, 8.507059e+37
        %v494 = vand.u32 %v482, 2147483648
        %v495 = vor.u32 1.1754944e-38, %v494
        %v496 = vsel %vm493, %v495, %v491
        %v497 = vmul.f32 1.0, %v496
        %v499 = vrot.slane %v364, 7
        %v501 = vadd.f32 %v473, %v499
        %v502 = vxor.u32 %v501, 2147483648
        %v503 = vmul.f32 %v502, 1.442695
        %v504 = vpow.pop %v503
        %v505 = vadd.f32 %v504, 1.0
        %v506 = vrcp.pop %v505
        %v507 = vmul.f32 %v505, %v506
        %v508 = vsub.f32 1.0, %v507
        %v509 = vmul.f32 %v506, %v508
        %v510 = vadd.f32 %v506, %v509
        %vm511 = vweird.f32 %v505
        %vm512 = vweird.f32 %v506
        %vm513 = vmor %vm511, %vm512
        %v514 = vsel %vm513, %v506, %v510
        %v515 = vand.u32 2147483647, %v505
        %vm516 = vcmp.eq.f32.partialorder %v515, 8.507059e+37
        %v517 = vand.u32 %v505, 2147483648
        %v518 = vor.u32 1.1754944e-38, %v517
        %v519 = vsel %vm516, %v518, %v514
        %v520 = vmul.f32 1.0, %v519
        %v521 = vld [vmem:[%s329 + $0x1] sm:$0x1]
        %v522 = vperm.slane %v521, 0
        %vm523 = vcmp.eq.s32.totalorder %v366, %v522
        %vm524 = vcmp.eq.s32.totalorder %v367, %v522
        %vm525 = vcmp.eq.s32.totalorder %v368, %v522
        %vm526 = vcmp.eq.s32.totalorder %v369, %v522
        %vm527 = vcmp.eq.s32.totalorder %v370, %v522
        %vm528 = vcmp.eq.s32.totalorder %v371, %v522
        %vm529 = vcmp.eq.s32.totalorder %v372, %v522
        %vm530 = vcmp.eq.s32.totalorder %v373, %v522
        %vm531 = vcmp.eq.s32.totalorder %v374, %v522
        %vm532 = vcmp.eq.s32.totalorder %v375, %v522
        %vm533 = vcmp.eq.s32.totalorder %v376, %v522
        %vm534 = vcmp.eq.s32.totalorder %v377, %v522
        %vm535 = vcmp.eq.s32.totalorder %v378, %v522
        %vm536 = vcmp.eq.s32.totalorder %v379, %v522
        %vm537 = vcmp.eq.s32.totalorder %v380, %v522
        %vm538 = vcmp.eq.s32.totalorder %v381, %v522
        %v539 = vsel %vm523, 1, 0
        %v540 = vsel %vm524, 1, 0
        %v541 = vsel %vm525, 1, 0
        %v542 = vsel %vm526, 1, 0
        %v543 = vsel %vm527, 1, 0
        %v544 = vsel %vm528, 1, 0
        %v545 = vsel %vm529, 1, 0
        %v546 = vsel %vm530, 1, 0
        %v547 = vsel %vm531, 1, 0
        %v548 = vsel %vm532, 1, 0
        %v549 = vsel %vm533, 1, 0
        %v550 = vsel %vm534, 1, 0
        %v551 = vsel %vm535, 1, 0
        %v552 = vsel %vm536, 1, 0
        %v553 = vsel %vm537, 1, 0
        %v554 = vsel %vm538, 1, 0
        %v555 = vcvt.s32.f32 %v539
        %v556 = vcvt.s32.f32 %v540
        %v557 = vcvt.s32.f32 %v541
        %v558 = vcvt.s32.f32 %v542
        %v559 = vcvt.s32.f32 %v543
        %v560 = vcvt.s32.f32 %v544
        %v561 = vcvt.s32.f32 %v545
        %v562 = vcvt.s32.f32 %v546
        %v563 = vcvt.s32.f32 %v547
        %v564 = vcvt.s32.f32 %v548
        %v565 = vcvt.s32.f32 %v549
        %v566 = vcvt.s32.f32 %v550
        %v567 = vcvt.s32.f32 %v551
        %v568 = vcvt.s32.f32 %v552
        %v569 = vcvt.s32.f32 %v553
        %v570 = vcvt.s32.f32 %v554
        %571 = vmatpush.msra.mxu0 %v570
        %572 = vmatpush.msra.mxu0 %v569
        %573 = vmatpush.msra.mxu0 %v568
        %574 = vmatpush.msra.mxu0 %v567
        %575 = vmatpush.msra.mxu0 %v566
        %576 = vmatpush.msra.mxu0 %v565
        %577 = vmatpush.msra.mxu0 %v564
        %578 = vmatpush.msra.mxu0 %v563
        %579 = vmatpush.msra.mxu0 %v562
        %580 = vmatpush.msra.mxu0 %v561
        %581 = vmatpush.msra.mxu0 %v560
        %582 = vmatpush.msra.mxu0 %v559
        %583 = vmatpush.msra.mxu0 %v558
        %584 = vmatpush.msra.mxu0 %v557
        %585 = vmatpush.msra.mxu0 %v556
        %586 = vmatpush.msra.mxu0 %v555
        %587 = vmatmul.f32.gmra.mxu0 %v330
        %v588 = vpop.f32.mrf.mxu0
        %v589 = vadd.f32 0.0, %v588
        %590 = vmatmul.f32.gmra.mxu0 %v331
        %v591 = vpop.f32.mrf.mxu0
        %v592 = vadd.f32 0.0, %v591
        %593 = vdwg.mxu0
        %594 = vmatpush.msra.mxu0 0.0
        %595 = vmatpush.msra.mxu0 0.0
        %596 = vmatpush.msra.mxu0 0.0
        %597 = vmatpush.msra.mxu0 0.0
        %598 = vmatpush.msra.mxu0 0.0
        %599 = vmatpush.msra.mxu0 0.0
        %600 = vmatpush.msra.mxu0 0.0
        %601 = vmatpush.msra.mxu0 0.0
        %602 = vmatpush.msra.mxu0 0.0
        %603 = vmatpush.msra.mxu0 0.0
        %604 = vmatpush.msra.mxu0 0.0
        %605 = vmatpush.msra.mxu0 0.0
        %606 = vmatpush.msra.mxu0 0.0
        %607 = vmatpush.msra.mxu0 0.0
        %608 = vmatpush.msra.mxu0 %v592
        %609 = vmatpush.msra.mxu0 %v589
        %610 = vmatmul.f32.gmra.mxu0 %v339
        %v611 = vpop.f32.mrf.mxu0
        %v612 = vadd.f32 0.0, %v611
        %613 = vdwg.mxu0
        %v614 = vadd.f32 %v612, %v476
        %v615 = vxor.u32 %v614, 2147483648
        %v616 = vmul.f32 %v615, 1.442695
        %v617 = vpow.pop %v616
        %v618 = vadd.f32 %v617, 1.0
        %v619 = vrcp.pop %v618
        %v620 = vmul.f32 %v618, %v619
        %v621 = vsub.f32 1.0, %v620
        %v622 = vmul.f32 %v619, %v621
        %v623 = vadd.f32 %v619, %v622
        %vm624 = vweird.f32 %v618
        %vm625 = vweird.f32 %v619
        %vm626 = vmor %vm624, %vm625
        %v627 = vsel %vm626, %v619, %v623
        %v628 = vand.u32 2147483647, %v618
        %vm629 = vcmp.eq.f32.partialorder %v628, 8.507059e+37
        %v630 = vand.u32 %v618, 2147483648
        %v631 = vor.u32 1.1754944e-38, %v630
        %v632 = vsel %vm629, %v631, %v627
        %v633 = vmul.f32 1.0, %v632
        %v634 = vadd.f32 %v612, %v499
        %v635 = vxor.u32 %v634, 2147483648
        %v636 = vmul.f32 %v635, 1.442695
        %v637 = vpow.pop %v636
        %v638 = vadd.f32 %v637, 1.0
        %v639 = vrcp.pop %v638
        %v640 = vmul.f32 %v638, %v639
        %v641 = vsub.f32 1.0, %v640
        %v642 = vmul.f32 %v639, %v641
        %v643 = vadd.f32 %v639, %v642
        %vm644 = vweird.f32 %v638
        %vm645 = vweird.f32 %v639
        %vm646 = vmor %vm644, %vm645
        %v647 = vsel %vm646, %v639, %v643
        %v648 = vand.u32 2147483647, %v638
        %vm649 = vcmp.eq.f32.partialorder %v648, 8.507059e+37
        %v650 = vand.u32 %v638, 2147483648
        %v651 = vor.u32 1.1754944e-38, %v650
        %v652 = vsel %vm649, %v651, %v647
        %v653 = vmul.f32 1.0, %v652
        %v654 = vld [vmem:[%s329 + $0x2] sm:$0x1]
        %v655 = vperm.slane %v654, 0
        %vm656 = vcmp.eq.s32.totalorder %v366, %v655
        %vm657 = vcmp.eq.s32.totalorder %v367, %v655
        %vm658 = vcmp.eq.s32.totalorder %v368, %v655
        %vm659 = vcmp.eq.s32.totalorder %v369, %v655
        %vm660 = vcmp.eq.s32.totalorder %v370, %v655
        %vm661 = vcmp.eq.s32.totalorder %v371, %v655
        %vm662 = vcmp.eq.s32.totalorder %v372, %v655
        %vm663 = vcmp.eq.s32.totalorder %v373, %v655
        %vm664 = vcmp.eq.s32.totalorder %v374, %v655
        %vm665 = vcmp.eq.s32.totalorder %v375, %v655
        %vm666 = vcmp.eq.s32.totalorder %v376, %v655
        %vm667 = vcmp.eq.s32.totalorder %v377, %v655
        %vm668 = vcmp.eq.s32.totalorder %v378, %v655
        %vm669 = vcmp.eq.s32.totalorder %v379, %v655
        %vm670 = vcmp.eq.s32.totalorder %v380, %v655
        %vm671 = vcmp.eq.s32.totalorder %v381, %v655
        %v672 = vsel %vm656, 1, 0
        %v673 = vsel %vm657, 1, 0
        %v674 = vsel %vm658, 1, 0
        %v675 = vsel %vm659, 1, 0
        %v676 = vsel %vm660, 1, 0
        %v677 = vsel %vm661, 1, 0
        %v678 = vsel %vm662, 1, 0
        %v679 = vsel %vm663, 1, 0
        %v680 = vsel %vm664, 1, 0
        %v681 = vsel %vm665, 1, 0
        %v682 = vsel %vm666, 1, 0
        %v683 = vsel %vm667, 1, 0
        %v684 = vsel %vm668, 1, 0
        %v685 = vsel %vm669, 1, 0
        %v686 = vsel %vm670, 1, 0
        %v687 = vsel %vm671, 1, 0
        %v688 = vcvt.s32.f32 %v672
        %v689 = vcvt.s32.f32 %v673
        %v690 = vcvt.s32.f32 %v674
        %v691 = vcvt.s32.f32 %v675
        %v692 = vcvt.s32.f32 %v676
        %v693 = vcvt.s32.f32 %v677
        %v694 = vcvt.s32.f32 %v678
        %v695 = vcvt.s32.f32 %v679
        %v696 = vcvt.s32.f32 %v680
        %v697 = vcvt.s32.f32 %v681
        %v698 = vcvt.s32.f32 %v682
        %v699 = vcvt.s32.f32 %v683
        %v700 = vcvt.s32.f32 %v684
        %v701 = vcvt.s32.f32 %v685
        %v702 = vcvt.s32.f32 %v686
        %v703 = vcvt.s32.f32 %v687
        %704 = vmatpush.msra.mxu0 %v703
        %705 = vmatpush.msra.mxu0 %v702
        %706 = vmatpush.msra.mxu0 %v701
        %707 = vmatpush.msra.mxu0 %v700
        %708 = vmatpush.msra.mxu0 %v699
        %709 = vmatpush.msra.mxu0 %v698
        %710 = vmatpush.msra.mxu0 %v697
        %711 = vmatpush.msra.mxu0 %v696
        %712 = vmatpush.msra.mxu0 %v695
        %713 = vmatpush.msra.mxu0 %v694
        %714 = vmatpush.msra.mxu0 %v693
        %715 = vmatpush.msra.mxu0 %v692
        %716 = vmatpush.msra.mxu0 %v691
        %717 = vmatpush.msra.mxu0 %v690
        %718 = vmatpush.msra.mxu0 %v689
        %719 = vmatpush.msra.mxu0 %v688
        %720 = vmatmul.f32.gmra.mxu0 %v330
        %v721 = vpop.f32.mrf.mxu0
        %v722 = vadd.f32 0.0, %v721
        %723 = vmatmul.f32.gmra.mxu0 %v331
        %v724 = vpop.f32.mrf.mxu0
        %v725 = vadd.f32 0.0, %v724
        %726 = vdwg.mxu0
        %727 = vmatpush.msra.mxu0 0.0
        %728 = vmatpush.msra.mxu0 0.0
        %729 = vmatpush.msra.mxu0 0.0
        %730 = vmatpush.msra.mxu0 0.0
        %731 = vmatpush.msra.mxu0 0.0
        %732 = vmatpush.msra.mxu0 0.0
        %733 = vmatpush.msra.mxu0 0.0
        %734 = vmatpush.msra.mxu0 0.0
        %735 = vmatpush.msra.mxu0 0.0
        %736 = vmatpush.msra.mxu0 0.0
        %737 = vmatpush.msra.mxu0 0.0
        %738 = vmatpush.msra.mxu0 0.0
        %739 = vmatpush.msra.mxu0 0.0
        %740 = vmatpush.msra.mxu0 0.0
        %741 = vmatpush.msra.mxu0 %v725
        %742 = vmatpush.msra.mxu0 %v722
        %743 = vmatmul.f32.gmra.mxu0 %v339
        %v744 = vpop.f32.mrf.mxu0
        %v745 = vadd.f32 0.0, %v744
        %746 = vdwg.mxu0
        %v747 = vadd.f32 %v745, %v476
        %v748 = vxor.u32 %v747, 2147483648
        %v749 = vmul.f32 %v748, 1.442695
        %v750 = vpow.pop %v749
        %v751 = vadd.f32 %v750, 1.0
        %v752 = vrcp.pop %v751
        %v753 = vmul.f32 %v751, %v752
        %v754 = vsub.f32 1.0, %v753
        %v755 = vmul.f32 %v752, %v754
        %v756 = vadd.f32 %v752, %v755
        %vm757 = vweird.f32 %v751
        %vm758 = vweird.f32 %v752
        %vm759 = vmor %vm757, %vm758
        %v760 = vsel %vm759, %v752, %v756
        %v761 = vand.u32 2147483647, %v751
        %vm762 = vcmp.eq.f32.partialorder %v761, 8.507059e+37
        %v763 = vand.u32 %v751, 2147483648
        %v764 = vor.u32 1.1754944e-38, %v763
        %v765 = vsel %vm762, %v764, %v760
        %v766 = vmul.f32 1.0, %v765
        %v767 = vadd.f32 %v745, %v499
        %v768 = vxor.u32 %v767, 2147483648
        %v769 = vmul.f32 %v768, 1.442695
        %v770 = vpow.pop %v769
        %v771 = vadd.f32 %v770, 1.0
        %v772 = vrcp.pop %v771
        %v773 = vmul.f32 %v771, %v772
        %v774 = vsub.f32 1.0, %v773
        %v775 = vmul.f32 %v772, %v774
        %v776 = vadd.f32 %v772, %v775
        %vm777 = vweird.f32 %v771
        %vm778 = vweird.f32 %v772
        %vm779 = vmor %vm777, %vm778
        %v780 = vsel %vm779, %v772, %v776
        %v781 = vand.u32 2147483647, %v771
        %vm782 = vcmp.eq.f32.partialorder %v781, 8.507059e+37
        %v783 = vand.u32 %v771, 2147483648
        %v784 = vor.u32 1.1754944e-38, %v783
        %v785 = vsel %vm782, %v784, %v780
        %v786 = vmul.f32 1.0, %v785
        %v787 = vld [vmem:[%s329 + $0x3] sm:$0x1]
        %v788 = vperm.slane %v787, 0
        %vm789 = vcmp.eq.s32.totalorder %v366, %v788
        %vm790 = vcmp.eq.s32.totalorder %v367, %v788
        %vm791 = vcmp.eq.s32.totalorder %v368, %v788
        %vm792 = vcmp.eq.s32.totalorder %v369, %v788
        %vm793 = vcmp.eq.s32.totalorder %v370, %v788
        %vm794 = vcmp.eq.s32.totalorder %v371, %v788
        %vm795 = vcmp.eq.s32.totalorder %v372, %v788
        %vm796 = vcmp.eq.s32.totalorder %v373, %v788
        %vm797 = vcmp.eq.s32.totalorder %v374, %v788
        %vm798 = vcmp.eq.s32.totalorder %v375, %v788
        %vm799 = vcmp.eq.s32.totalorder %v376, %v788
        %vm800 = vcmp.eq.s32.totalorder %v377, %v788
        %vm801 = vcmp.eq.s32.totalorder %v378, %v788
        %vm802 = vcmp.eq.s32.totalorder %v379, %v788
        %vm803 = vcmp.eq.s32.totalorder %v380, %v788
        %vm804 = vcmp.eq.s32.totalorder %v381, %v788
        %v805 = vsel %vm789, 1, 0
        %v806 = vsel %vm790, 1, 0
        %v807 = vsel %vm791, 1, 0
        %v808 = vsel %vm792, 1, 0
        %v809 = vsel %vm793, 1, 0
        %v810 = vsel %vm794, 1, 0
        %v811 = vsel %vm795, 1, 0
        %v812 = vsel %vm796, 1, 0
        %v813 = vsel %vm797, 1, 0
        %v814 = vsel %vm798, 1, 0
        %v815 = vsel %vm799, 1, 0
        %v816 = vsel %vm800, 1, 0
        %v817 = vsel %vm801, 1, 0
        %v818 = vsel %vm802, 1, 0
        %v819 = vsel %vm803, 1, 0
        %v820 = vsel %vm804, 1, 0
        %v821 = vcvt.s32.f32 %v805
        %v822 = vcvt.s32.f32 %v806
        %v823 = vcvt.s32.f32 %v807
        %v824 = vcvt.s32.f32 %v808
        %v825 = vcvt.s32.f32 %v809
        %v826 = vcvt.s32.f32 %v810
        %v827 = vcvt.s32.f32 %v811
        %v828 = vcvt.s32.f32 %v812
        %v829 = vcvt.s32.f32 %v813
        %v830 = vcvt.s32.f32 %v814
        %v831 = vcvt.s32.f32 %v815
        %v832 = vcvt.s32.f32 %v816
        %v833 = vcvt.s32.f32 %v817
        %v834 = vcvt.s32.f32 %v818
        %v835 = vcvt.s32.f32 %v819
        %v836 = vcvt.s32.f32 %v820
        %837 = vmatpush.msra.mxu0 %v836
        %838 = vmatpush.msra.mxu0 %v835
        %839 = vmatpush.msra.mxu0 %v834
        %840 = vmatpush.msra.mxu0 %v833
        %841 = vmatpush.msra.mxu0 %v832
        %842 = vmatpush.msra.mxu0 %v831
        %843 = vmatpush.msra.mxu0 %v830
        %844 = vmatpush.msra.mxu0 %v829
        %845 = vmatpush.msra.mxu0 %v828
        %846 = vmatpush.msra.mxu0 %v827
        %847 = vmatpush.msra.mxu0 %v826
        %848 = vmatpush.msra.mxu0 %v825
        %849 = vmatpush.msra.mxu0 %v824
        %850 = vmatpush.msra.mxu0 %v823
        %851 = vmatpush.msra.mxu0 %v822
        %852 = vmatpush.msra.mxu0 %v821
        %853 = vmatmul.f32.gmra.mxu0 %v330
        %v854 = vpop.f32.mrf.mxu0
        %v855 = vadd.f32 0.0, %v854
        %856 = vmatmul.f32.gmra.mxu0 %v331
        %v857 = vpop.f32.mrf.mxu0
        %v858 = vadd.f32 0.0, %v857
        %859 = vdwg.mxu0
        %860 = vmatpush.msra.mxu0 0.0
        %861 = vmatpush.msra.mxu0 0.0
        %862 = vmatpush.msra.mxu0 0.0
        %863 = vmatpush.msra.mxu0 0.0
        %864 = vmatpush.msra.mxu0 0.0
        %865 = vmatpush.msra.mxu0 0.0
        %866 = vmatpush.msra.mxu0 0.0
        %867 = vmatpush.msra.mxu0 0.0
        %868 = vmatpush.msra.mxu0 0.0
        %869 = vmatpush.msra.mxu0 0.0
        %870 = vmatpush.msra.mxu0 0.0
        %871 = vmatpush.msra.mxu0 0.0
        %872 = vmatpush.msra.mxu0 0.0
        %873 = vmatpush.msra.mxu0 0.0
        %874 = vmatpush.msra.mxu0 %v858
        %875 = vmatpush.msra.mxu0 %v855
        %876 = vmatmul.f32.gmra.mxu0 %v339
        %v877 = vpop.f32.mrf.mxu0
        %v878 = vadd.f32 0.0, %v877
        %879 = vdwg.mxu0
        %v880 = vadd.f32 %v878, %v476
        %v881 = vxor.u32 %v880, 2147483648
        %v882 = vmul.f32 %v881, 1.442695
        %v883 = vpow.pop %v882
        %v884 = vadd.f32 %v883, 1.0
        %v885 = vrcp.pop %v884
        %v886 = vmul.f32 %v884, %v885
        %v887 = vsub.f32 1.0, %v886
        %v888 = vmul.f32 %v885, %v887
        %v889 = vadd.f32 %v885, %v888
        %vm890 = vweird.f32 %v884
        %vm891 = vweird.f32 %v885
        %vm892 = vmor %vm890, %vm891
        %v893 = vsel %vm892, %v885, %v889
        %v894 = vand.u32 2147483647, %v884
        %vm895 = vcmp.eq.f32.partialorder %v894, 8.507059e+37
        %v896 = vand.u32 %v884, 2147483648
        %v897 = vor.u32 1.1754944e-38, %v896
        %v898 = vsel %vm895, %v897, %v893
        %v899 = vmul.f32 1.0, %v898
        %v900 = vadd.f32 %v878, %v499
        %v901 = vxor.u32 %v900, 2147483648
        %v902 = vmul.f32 %v901, 1.442695
        %v903 = vpow.pop %v902
        %v904 = vadd.f32 %v903, 1.0
        %v905 = vrcp.pop %v904
        %v906 = vmul.f32 %v904, %v905
        %v907 = vsub.f32 1.0, %v906
        %v908 = vmul.f32 %v905, %v907
        %v909 = vadd.f32 %v905, %v908
        %vm910 = vweird.f32 %v904
        %vm911 = vweird.f32 %v905
        %vm912 = vmor %vm910, %vm911
        %v913 = vsel %vm912, %v905, %v909
        %v914 = vand.u32 2147483647, %v904
        %vm915 = vcmp.eq.f32.partialorder %v914, 8.507059e+37
        %v916 = vand.u32 %v904, 2147483648
        %v917 = vor.u32 1.1754944e-38, %v916
        %v918 = vsel %vm915, %v917, %v913
        %v919 = vmul.f32 1.0, %v918
        %v920 = vld [vmem:[%s329 + $0x4] sm:$0x1]
        %v921 = vperm.slane %v920, 0
        %vm922 = vcmp.eq.s32.totalorder %v366, %v921
        %vm923 = vcmp.eq.s32.totalorder %v367, %v921
        %vm924 = vcmp.eq.s32.totalorder %v368, %v921
        %vm925 = vcmp.eq.s32.totalorder %v369, %v921
        %vm926 = vcmp.eq.s32.totalorder %v370, %v921
        %vm927 = vcmp.eq.s32.totalorder %v371, %v921
        %vm928 = vcmp.eq.s32.totalorder %v372, %v921
        %vm929 = vcmp.eq.s32.totalorder %v373, %v921
        %vm930 = vcmp.eq.s32.totalorder %v374, %v921
        %vm931 = vcmp.eq.s32.totalorder %v375, %v921
        %vm932 = vcmp.eq.s32.totalorder %v376, %v921
        %vm933 = vcmp.eq.s32.totalorder %v377, %v921
        %vm934 = vcmp.eq.s32.totalorder %v378, %v921
        %vm935 = vcmp.eq.s32.totalorder %v379, %v921
        %vm936 = vcmp.eq.s32.totalorder %v380, %v921
        %vm937 = vcmp.eq.s32.totalorder %v381, %v921
        %v938 = vsel %vm922, 1, 0
        %v939 = vsel %vm923, 1, 0
        %v940 = vsel %vm924, 1, 0
        %v941 = vsel %vm925, 1, 0
        %v942 = vsel %vm926, 1, 0
        %v943 = vsel %vm927, 1, 0
        %v944 = vsel %vm928, 1, 0
        %v945 = vsel %vm929, 1, 0
        %v946 = vsel %vm930, 1, 0
        %v947 = vsel %vm931, 1, 0
        %v948 = vsel %vm932, 1, 0
        %v949 = vsel %vm933, 1, 0
        %v950 = vsel %vm934, 1, 0
        %v951 = vsel %vm935, 1, 0
        %v952 = vsel %vm936, 1, 0
        %v953 = vsel %vm937, 1, 0
        %v954 = vcvt.s32.f32 %v938
        %v955 = vcvt.s32.f32 %v939
        %v956 = vcvt.s32.f32 %v940
        %v957 = vcvt.s32.f32 %v941
        %v958 = vcvt.s32.f32 %v942
        %v959 = vcvt.s32.f32 %v943
        %v960 = vcvt.s32.f32 %v944
        %v961 = vcvt.s32.f32 %v945
        %v962 = vcvt.s32.f32 %v946
        %v963 = vcvt.s32.f32 %v947
        %v964 = vcvt.s32.f32 %v948
        %v965 = vcvt.s32.f32 %v949
        %v966 = vcvt.s32.f32 %v950
        %v967 = vcvt.s32.f32 %v951
        %v968 = vcvt.s32.f32 %v952
        %v969 = vcvt.s32.f32 %v953
        %970 = vmatpush.msra.mxu0 %v969
        %971 = vmatpush.msra.mxu0 %v968
        %972 = vmatpush.msra.mxu0 %v967
        %973 = vmatpush.msra.mxu0 %v966
        %974 = vmatpush.msra.mxu0 %v965
        %975 = vmatpush.msra.mxu0 %v964
        %976 = vmatpush.msra.mxu0 %v963
        %977 = vmatpush.msra.mxu0 %v962
        %978 = vmatpush.msra.mxu0 %v961
        %979 = vmatpush.msra.mxu0 %v960
        %980 = vmatpush.msra.mxu0 %v959
        %981 = vmatpush.msra.mxu0 %v958
        %982 = vmatpush.msra.mxu0 %v957
        %983 = vmatpush.msra.mxu0 %v956
        %984 = vmatpush.msra.mxu0 %v955
        %985 = vmatpush.msra.mxu0 %v954
        %986 = vmatmul.f32.gmra.mxu0 %v330
        %v987 = vpop.f32.mrf.mxu0
        %v988 = vadd.f32 0.0, %v987
        %989 = vmatmul.f32.gmra.mxu0 %v331
        %v990 = vpop.f32.mrf.mxu0
        %v991 = vadd.f32 0.0, %v990
        %992 = vdwg.mxu0
        %993 = vmatpush.msra.mxu0 0.0
        %994 = vmatpush.msra.mxu0 0.0
        %995 = vmatpush.msra.mxu0 0.0
        %996 = vmatpush.msra.mxu0 0.0
        %997 = vmatpush.msra.mxu0 0.0
        %998 = vmatpush.msra.mxu0 0.0
        %999 = vmatpush.msra.mxu0 0.0
        %1000 = vmatpush.msra.mxu0 0.0
        %1001 = vmatpush.msra.mxu0 0.0
        %1002 = vmatpush.msra.mxu0 0.0
        %1003 = vmatpush.msra.mxu0 0.0
        %1004 = vmatpush.msra.mxu0 0.0
        %1005 = vmatpush.msra.mxu0 0.0
        %1006 = vmatpush.msra.mxu0 0.0
        %1007 = vmatpush.msra.mxu0 %v991
        %1008 = vmatpush.msra.mxu0 %v988
        %1009 = vmatmul.f32.gmra.mxu0 %v339
        %v1010 = vpop.f32.mrf.mxu0
        %v1011 = vadd.f32 0.0, %v1010
        %1012 = vdwg.mxu0
        %v1013 = vadd.f32 %v1011, %v476
        %v1014 = vxor.u32 %v1013, 2147483648
        %v1015 = vmul.f32 %v1014, 1.442695
        %v1016 = vpow.pop %v1015
        %v1017 = vadd.f32 %v1016, 1.0
        %v1018 = vrcp.pop %v1017
        %v1019 = vmul.f32 %v1017, %v1018
        %v1020 = vsub.f32 1.0, %v1019
        %v1021 = vmul.f32 %v1018, %v1020
        %v1022 = vadd.f32 %v1018, %v1021
        %vm1023 = vweird.f32 %v1017
        %vm1024 = vweird.f32 %v1018
        %vm1025 = vmor %vm1023, %vm1024
        %v1026 = vsel %vm1025, %v1018, %v1022
        %v1027 = vand.u32 2147483647, %v1017
        %vm1028 = vcmp.eq.f32.partialorder %v1027, 8.507059e+37
        %v1029 = vand.u32 %v1017, 2147483648
        %v1030 = vor.u32 1.1754944e-38, %v1029
        %v1031 = vsel %vm1028, %v1030, %v1026
        %v1032 = vmul.f32 1.0, %v1031
        %v1033 = vadd.f32 %v1011, %v499
        %v1034 = vxor.u32 %v1033, 2147483648
        %v1035 = vmul.f32 %v1034, 1.442695
        %v1036 = vpow.pop %v1035
        %v1037 = vadd.f32 %v1036, 1.0
        %v1038 = vrcp.pop %v1037
        %v1039 = vmul.f32 %v1037, %v1038
        %v1040 = vsub.f32 1.0, %v1039
        %v1041 = vmul.f32 %v1038, %v1040
        %v1042 = vadd.f32 %v1038, %v1041
        %vm1043 = vweird.f32 %v1037
        %vm1044 = vweird.f32 %v1038
        %vm1045 = vmor %vm1043, %vm1044
        %v1046 = vsel %vm1045, %v1038, %v1042
        %v1047 = vand.u32 2147483647, %v1037
        %vm1048 = vcmp.eq.f32.partialorder %v1047, 8.507059e+37
        %v1049 = vand.u32 %v1037, 2147483648
        %v1050 = vor.u32 1.1754944e-38, %v1049
        %v1051 = vsel %vm1048, %v1050, %v1046
        %v1052 = vmul.f32 1.0, %v1051
        %v1053 = vld [vmem:[%s329 + $0x5] sm:$0x1]
        %v1054 = vperm.slane %v1053, 0
        %vm1055 = vcmp.eq.s32.totalorder %v366, %v1054
        %vm1056 = vcmp.eq.s32.totalorder %v367, %v1054
        %vm1057 = vcmp.eq.s32.totalorder %v368, %v1054
        %vm1058 = vcmp.eq.s32.totalorder %v369, %v1054
        %vm1059 = vcmp.eq.s32.totalorder %v370, %v1054
        %vm1060 = vcmp.eq.s32.totalorder %v371, %v1054
        %vm1061 = vcmp.eq.s32.totalorder %v372, %v1054
        %vm1062 = vcmp.eq.s32.totalorder %v373, %v1054
        %vm1063 = vcmp.eq.s32.totalorder %v374, %v1054
        %vm1064 = vcmp.eq.s32.totalorder %v375, %v1054
        %vm1065 = vcmp.eq.s32.totalorder %v376, %v1054
        %vm1066 = vcmp.eq.s32.totalorder %v377, %v1054
        %vm1067 = vcmp.eq.s32.totalorder %v378, %v1054
        %vm1068 = vcmp.eq.s32.totalorder %v379, %v1054
        %vm1069 = vcmp.eq.s32.totalorder %v380, %v1054
        %vm1070 = vcmp.eq.s32.totalorder %v381, %v1054
        %v1071 = vsel %vm1055, 1, 0
        %v1072 = vsel %vm1056, 1, 0
        %v1073 = vsel %vm1057, 1, 0
        %v1074 = vsel %vm1058, 1, 0
        %v1075 = vsel %vm1059, 1, 0
        %v1076 = vsel %vm1060, 1, 0
        %v1077 = vsel %vm1061, 1, 0
        %v1078 = vsel %vm1062, 1, 0
        %v1079 = vsel %vm1063, 1, 0
        %v1080 = vsel %vm1064, 1, 0
        %v1081 = vsel %vm1065, 1, 0
        %v1082 = vsel %vm1066, 1, 0
        %v1083 = vsel %vm1067, 1, 0
        %v1084 = vsel %vm1068, 1, 0
        %v1085 = vsel %vm1069, 1, 0
        %v1086 = vsel %vm1070, 1, 0
        %v1087 = vcvt.s32.f32 %v1071
        %v1088 = vcvt.s32.f32 %v1072
        %v1089 = vcvt.s32.f32 %v1073
        %v1090 = vcvt.s32.f32 %v1074
        %v1091 = vcvt.s32.f32 %v1075
        %v1092 = vcvt.s32.f32 %v1076
        %v1093 = vcvt.s32.f32 %v1077
        %v1094 = vcvt.s32.f32 %v1078
        %v1095 = vcvt.s32.f32 %v1079
        %v1096 = vcvt.s32.f32 %v1080
        %v1097 = vcvt.s32.f32 %v1081
        %v1098 = vcvt.s32.f32 %v1082
        %v1099 = vcvt.s32.f32 %v1083
        %v1100 = vcvt.s32.f32 %v1084
        %v1101 = vcvt.s32.f32 %v1085
        %v1102 = vcvt.s32.f32 %v1086
        %1103 = vmatpush.msra.mxu0 %v1102
        %1104 = vmatpush.msra.mxu0 %v1101
        %1105 = vmatpush.msra.mxu0 %v1100
        %1106 = vmatpush.msra.mxu0 %v1099
        %1107 = vmatpush.msra.mxu0 %v1098
        %1108 = vmatpush.msra.mxu0 %v1097
        %1109 = vmatpush.msra.mxu0 %v1096
        %1110 = vmatpush.msra.mxu0 %v1095
        %1111 = vmatpush.msra.mxu0 %v1094
        %1112 = vmatpush.msra.mxu0 %v1093
        %1113 = vmatpush.msra.mxu0 %v1092
        %1114 = vmatpush.msra.mxu0 %v1091
        %1115 = vmatpush.msra.mxu0 %v1090
        %1116 = vmatpush.msra.mxu0 %v1089
        %1117 = vmatpush.msra.mxu0 %v1088
        %1118 = vmatpush.msra.mxu0 %v1087
        %1119 = vmatmul.f32.gmra.mxu0 %v330
        %v1120 = vpop.f32.mrf.mxu0
        %v1121 = vadd.f32 0.0, %v1120
        %1122 = vmatmul.f32.gmra.mxu0 %v331
        %v1123 = vpop.f32.mrf.mxu0
        %v1124 = vadd.f32 0.0, %v1123
        %1125 = vdwg.mxu0
        %1126 = vmatpush.msra.mxu0 0.0
        %1127 = vmatpush.msra.mxu0 0.0
        %1128 = vmatpush.msra.mxu0 0.0
        %1129 = vmatpush.msra.mxu0 0.0
        %1130 = vmatpush.msra.mxu0 0.0
        %1131 = vmatpush.msra.mxu0 0.0
        %1132 = vmatpush.msra.mxu0 0.0
        %1133 = vmatpush.msra.mxu0 0.0
        %1134 = vmatpush.msra.mxu0 0.0
        %1135 = vmatpush.msra.mxu0 0.0
        %1136 = vmatpush.msra.mxu0 0.0
        %1137 = vmatpush.msra.mxu0 0.0
        %1138 = vmatpush.msra.mxu0 0.0
        %1139 = vmatpush.msra.mxu0 0.0
        %1140 = vmatpush.msra.mxu0 %v1124
        %1141 = vmatpush.msra.mxu0 %v1121
        %1142 = vmatmul.f32.gmra.mxu0 %v339
        %v1143 = vpop.f32.mrf.mxu0
        %v1144 = vadd.f32 0.0, %v1143
        %1145 = vdwg.mxu0
        %v1146 = vadd.f32 %v1144, %v476
        %v1147 = vxor.u32 %v1146, 2147483648
        %v1148 = vmul.f32 %v1147, 1.442695
        %v1149 = vpow.pop %v1148
        %v1150 = vadd.f32 %v1149, 1.0
        %v1151 = vrcp.pop %v1150
        %v1152 = vmul.f32 %v1150, %v1151
        %v1153 = vsub.f32 1.0, %v1152
        %v1154 = vmul.f32 %v1151, %v1153
        %v1155 = vadd.f32 %v1151, %v1154
        %vm1156 = vweird.f32 %v1150
        %vm1157 = vweird.f32 %v1151
        %vm1158 = vmor %vm1156, %vm1157
        %v1159 = vsel %vm1158, %v1151, %v1155
        %v1160 = vand.u32 2147483647, %v1150
        %vm1161 = vcmp.eq.f32.partialorder %v1160, 8.507059e+37
        %v1162 = vand.u32 %v1150, 2147483648
        %v1163 = vor.u32 1.1754944e-38, %v1162
        %v1164 = vsel %vm1161, %v1163, %v1159
        %v1165 = vmul.f32 1.0, %v1164
        %v1166 = vadd.f32 %v1144, %v499
        %v1167 = vxor.u32 %v1166, 2147483648
        %v1168 = vmul.f32 %v1167, 1.442695
        %v1169 = vpow.pop %v1168
        %v1170 = vadd.f32 %v1169, 1.0
        %v1171 = vrcp.pop %v1170
        %v1172 = vmul.f32 %v1170, %v1171
        %v1173 = vsub.f32 1.0, %v1172
        %v1174 = vmul.f32 %v1171, %v1173
        %v1175 = vadd.f32 %v1171, %v1174
        %vm1176 = vweird.f32 %v1170
        %vm1177 = vweird.f32 %v1171
        %vm1178 = vmor %vm1176, %vm1177
        %v1179 = vsel %vm1178, %v1171, %v1175
        %v1180 = vand.u32 2147483647, %v1170
        %vm1181 = vcmp.eq.f32.partialorder %v1180, 8.507059e+37
        %v1182 = vand.u32 %v1170, 2147483648
        %v1183 = vor.u32 1.1754944e-38, %v1182
        %v1184 = vsel %vm1181, %v1183, %v1179
        %v1185 = vmul.f32 1.0, %v1184
        %v1186 = vld [vmem:[%s329 + $0x6] sm:$0x1]
        %v1187 = vperm.slane %v1186, 0
        %vm1188 = vcmp.eq.s32.totalorder %v366, %v1187
        %vm1189 = vcmp.eq.s32.totalorder %v367, %v1187
        %vm1190 = vcmp.eq.s32.totalorder %v368, %v1187
        %vm1191 = vcmp.eq.s32.totalorder %v369, %v1187
        %vm1192 = vcmp.eq.s32.totalorder %v370, %v1187
        %vm1193 = vcmp.eq.s32.totalorder %v371, %v1187
        %vm1194 = vcmp.eq.s32.totalorder %v372, %v1187
        %vm1195 = vcmp.eq.s32.totalorder %v373, %v1187
        %vm1196 = vcmp.eq.s32.totalorder %v374, %v1187
        %vm1197 = vcmp.eq.s32.totalorder %v375, %v1187
        %vm1198 = vcmp.eq.s32.totalorder %v376, %v1187
        %vm1199 = vcmp.eq.s32.totalorder %v377, %v1187
        %vm1200 = vcmp.eq.s32.totalorder %v378, %v1187
        %vm1201 = vcmp.eq.s32.totalorder %v379, %v1187
        %vm1202 = vcmp.eq.s32.totalorder %v380, %v1187
        %vm1203 = vcmp.eq.s32.totalorder %v381, %v1187
        %v1204 = vsel %vm1188, 1, 0
        %v1205 = vsel %vm1189, 1, 0
        %v1206 = vsel %vm1190, 1, 0
        %v1207 = vsel %vm1191, 1, 0
        %v1208 = vsel %vm1192, 1, 0
        %v1209 = vsel %vm1193, 1, 0
        %v1210 = vsel %vm1194, 1, 0
        %v1211 = vsel %vm1195, 1, 0
        %v1212 = vsel %vm1196, 1, 0
        %v1213 = vsel %vm1197, 1, 0
        %v1214 = vsel %vm1198, 1, 0
        %v1215 = vsel %vm1199, 1, 0
        %v1216 = vsel %vm1200, 1, 0
        %v1217 = vsel %vm1201, 1, 0
        %v1218 = vsel %vm1202, 1, 0
        %v1219 = vsel %vm1203, 1, 0
        %v1220 = vcvt.s32.f32 %v1204
        %v1221 = vcvt.s32.f32 %v1205
        %v1222 = vcvt.s32.f32 %v1206
        %v1223 = vcvt.s32.f32 %v1207
        %v1224 = vcvt.s32.f32 %v1208
        %v1225 = vcvt.s32.f32 %v1209
        %v1226 = vcvt.s32.f32 %v1210
        %v1227 = vcvt.s32.f32 %v1211
        %v1228 = vcvt.s32.f32 %v1212
        %v1229 = vcvt.s32.f32 %v1213
        %v1230 = vcvt.s32.f32 %v1214
        %v1231 = vcvt.s32.f32 %v1215
        %v1232 = vcvt.s32.f32 %v1216
        %v1233 = vcvt.s32.f32 %v1217
        %v1234 = vcvt.s32.f32 %v1218
        %v1235 = vcvt.s32.f32 %v1219
        %1236 = vmatpush.msra.mxu0 %v1235
        %1237 = vmatpush.msra.mxu0 %v1234
        %1238 = vmatpush.msra.mxu0 %v1233
        %1239 = vmatpush.msra.mxu0 %v1232
        %1240 = vmatpush.msra.mxu0 %v1231
        %1241 = vmatpush.msra.mxu0 %v1230
        %1242 = vmatpush.msra.mxu0 %v1229
        %1243 = vmatpush.msra.mxu0 %v1228
        %1244 = vmatpush.msra.mxu0 %v1227
        %1245 = vmatpush.msra.mxu0 %v1226
        %1246 = vmatpush.msra.mxu0 %v1225
        %1247 = vmatpush.msra.mxu0 %v1224
        %1248 = vmatpush.msra.mxu0 %v1223
        %1249 = vmatpush.msra.mxu0 %v1222
        %1250 = vmatpush.msra.mxu0 %v1221
        %1251 = vmatpush.msra.mxu0 %v1220
        %1252 = vmatmul.f32.gmra.mxu0 %v330
        %v1253 = vpop.f32.mrf.mxu0
        %v1254 = vadd.f32 0.0, %v1253
        %1255 = vmatmul.f32.gmra.mxu0 %v331
        %v1256 = vpop.f32.mrf.mxu0
        %v1257 = vadd.f32 0.0, %v1256
        %1258 = vdwg.mxu0
        %1259 = vmatpush.msra.mxu0 0.0
        %1260 = vmatpush.msra.mxu0 0.0
        %1261 = vmatpush.msra.mxu0 0.0
        %1262 = vmatpush.msra.mxu0 0.0
        %1263 = vmatpush.msra.mxu0 0.0
        %1264 = vmatpush.msra.mxu0 0.0
        %1265 = vmatpush.msra.mxu0 0.0
        %1266 = vmatpush.msra.mxu0 0.0
        %1267 = vmatpush.msra.mxu0 0.0
        %1268 = vmatpush.msra.mxu0 0.0
        %1269 = vmatpush.msra.mxu0 0.0
        %1270 = vmatpush.msra.mxu0 0.0
        %1271 = vmatpush.msra.mxu0 0.0
        %1272 = vmatpush.msra.mxu0 0.0
        %1273 = vmatpush.msra.mxu0 %v1257
        %1274 = vmatpush.msra.mxu0 %v1254
        %1275 = vmatmul.f32.gmra.mxu0 %v339
        %v1276 = vpop.f32.mrf.mxu0
        %v1277 = vadd.f32 0.0, %v1276
        %1278 = vdwg.mxu0
        %v1279 = vadd.f32 %v1277, %v476
        %v1280 = vxor.u32 %v1279, 2147483648
        %v1281 = vmul.f32 %v1280, 1.442695
        %v1282 = vpow.pop %v1281
        %v1283 = vadd.f32 %v1282, 1.0
        %v1284 = vrcp.pop %v1283
        %v1285 = vmul.f32 %v1283, %v1284
        %v1286 = vsub.f32 1.0, %v1285
        %v1287 = vmul.f32 %v1284, %v1286
        %v1288 = vadd.f32 %v1284, %v1287
        %vm1289 = vweird.f32 %v1283
        %vm1290 = vweird.f32 %v1284
        %vm1291 = vmor %vm1289, %vm1290
        %v1292 = vsel %vm1291, %v1284, %v1288
        %v1293 = vand.u32 2147483647, %v1283
        %vm1294 = vcmp.eq.f32.partialorder %v1293, 8.507059e+37
        %v1295 = vand.u32 %v1283, 2147483648
        %v1296 = vor.u32 1.1754944e-38, %v1295
        %v1297 = vsel %vm1294, %v1296, %v1292
        %v1298 = vmul.f32 1.0, %v1297
        %v1299 = vadd.f32 %v1277, %v499
        %v1300 = vxor.u32 %v1299, 2147483648
        %v1301 = vmul.f32 %v1300, 1.442695
        %v1302 = vpow.pop %v1301
        %v1303 = vadd.f32 %v1302, 1.0
        %v1304 = vrcp.pop %v1303
        %v1305 = vmul.f32 %v1303, %v1304
        %v1306 = vsub.f32 1.0, %v1305
        %v1307 = vmul.f32 %v1304, %v1306
        %v1308 = vadd.f32 %v1304, %v1307
        %vm1309 = vweird.f32 %v1303
        %vm1310 = vweird.f32 %v1304
        %vm1311 = vmor %vm1309, %vm1310
        %v1312 = vsel %vm1311, %v1304, %v1308
        %v1313 = vand.u32 2147483647, %v1303
        %vm1314 = vcmp.eq.f32.partialorder %v1313, 8.507059e+37
        %v1315 = vand.u32 %v1303, 2147483648
        %v1316 = vor.u32 1.1754944e-38, %v1315
        %v1317 = vsel %vm1314, %v1316, %v1312
        %v1318 = vmul.f32 1.0, %v1317
        %v1319 = vld [vmem:[%s329 + $0x7] sm:$0x1]
        %v1320 = vperm.slane %v1319, 0
        %vm1321 = vcmp.eq.s32.totalorder %v366, %v1320
        %vm1322 = vcmp.eq.s32.totalorder %v367, %v1320
        %vm1323 = vcmp.eq.s32.totalorder %v368, %v1320
        %vm1324 = vcmp.eq.s32.totalorder %v369, %v1320
        %vm1325 = vcmp.eq.s32.totalorder %v370, %v1320
        %vm1326 = vcmp.eq.s32.totalorder %v371, %v1320
        %vm1327 = vcmp.eq.s32.totalorder %v372, %v1320
        %vm1328 = vcmp.eq.s32.totalorder %v373, %v1320
        %vm1329 = vcmp.eq.s32.totalorder %v374, %v1320
        %vm1330 = vcmp.eq.s32.totalorder %v375, %v1320
        %vm1331 = vcmp.eq.s32.totalorder %v376, %v1320
        %vm1332 = vcmp.eq.s32.totalorder %v377, %v1320
        %vm1333 = vcmp.eq.s32.totalorder %v378, %v1320
        %vm1334 = vcmp.eq.s32.totalorder %v379, %v1320
        %vm1335 = vcmp.eq.s32.totalorder %v380, %v1320
        %vm1336 = vcmp.eq.s32.totalorder %v381, %v1320
        %v1337 = vsel %vm1321, 1, 0
        %v1338 = vsel %vm1322, 1, 0
        %v1339 = vsel %vm1323, 1, 0
        %v1340 = vsel %vm1324, 1, 0
        %v1341 = vsel %vm1325, 1, 0
        %v1342 = vsel %vm1326, 1, 0
        %v1343 = vsel %vm1327, 1, 0
        %v1344 = vsel %vm1328, 1, 0
        %v1345 = vsel %vm1329, 1, 0
        %v1346 = vsel %vm1330, 1, 0
        %v1347 = vsel %vm1331, 1, 0
        %v1348 = vsel %vm1332, 1, 0
        %v1349 = vsel %vm1333, 1, 0
        %v1350 = vsel %vm1334, 1, 0
        %v1351 = vsel %vm1335, 1, 0
        %v1352 = vsel %vm1336, 1, 0
        %v1353 = vcvt.s32.f32 %v1337
        %v1354 = vcvt.s32.f32 %v1338
        %v1355 = vcvt.s32.f32 %v1339
        %v1356 = vcvt.s32.f32 %v1340
        %v1357 = vcvt.s32.f32 %v1341
        %v1358 = vcvt.s32.f32 %v1342
        %v1359 = vcvt.s32.f32 %v1343
        %v1360 = vcvt.s32.f32 %v1344
        %v1361 = vcvt.s32.f32 %v1345
        %v1362 = vcvt.s32.f32 %v1346
        %v1363 = vcvt.s32.f32 %v1347
        %v1364 = vcvt.s32.f32 %v1348
        %v1365 = vcvt.s32.f32 %v1349
        %v1366 = vcvt.s32.f32 %v1350
        %v1367 = vcvt.s32.f32 %v1351
        %v1368 = vcvt.s32.f32 %v1352
        %1369 = vmatpush.msra.mxu0 %v1368
        %1370 = vmatpush.msra.mxu0 %v1367
        %1371 = vmatpush.msra.mxu0 %v1366
        %1372 = vmatpush.msra.mxu0 %v1365
        %1373 = vmatpush.msra.mxu0 %v1364
        %1374 = vmatpush.msra.mxu0 %v1363
        %1375 = vmatpush.msra.mxu0 %v1362
        %1376 = vmatpush.msra.mxu0 %v1361
        %1377 = vmatpush.msra.mxu0 %v1360
        %1378 = vmatpush.msra.mxu0 %v1359
        %1379 = vmatpush.msra.mxu0 %v1358
        %1380 = vmatpush.msra.mxu0 %v1357
        %1381 = vmatpush.msra.mxu0 %v1356
        %1382 = vmatpush.msra.mxu0 %v1355
        %1383 = vmatpush.msra.mxu0 %v1354
        %1384 = vmatpush.msra.mxu0 %v1353
        %1385 = vmatmul.f32.gmra.mxu0 %v330
        %v1386 = vpop.f32.mrf.mxu0
        %v1387 = vadd.f32 0.0, %v1386
        %1388 = vmatmul.f32.gmra.mxu0 %v331
        %v1389 = vpop.f32.mrf.mxu0
        %v1390 = vadd.f32 0.0, %v1389
        %1391 = vdwg.mxu0
        %1392 = vmatpush.msra.mxu0 0.0
        %1393 = vmatpush.msra.mxu0 0.0
        %1394 = vmatpush.msra.mxu0 0.0
        %1395 = vmatpush.msra.mxu0 0.0
        %1396 = vmatpush.msra.mxu0 0.0
        %1397 = vmatpush.msra.mxu0 0.0
        %1398 = vmatpush.msra.mxu0 0.0
        %1399 = vmatpush.msra.mxu0 0.0
        %1400 = vmatpush.msra.mxu0 0.0
        %1401 = vmatpush.msra.mxu0 0.0
        %1402 = vmatpush.msra.mxu0 0.0
        %1403 = vmatpush.msra.mxu0 0.0
        %1404 = vmatpush.msra.mxu0 0.0
        %1405 = vmatpush.msra.mxu0 0.0
        %1406 = vmatpush.msra.mxu0 %v1390
        %1407 = vmatpush.msra.mxu0 %v1387
        %1408 = vmatmul.f32.gmra.mxu0 %v339
        %v1409 = vpop.f32.mrf.mxu0
        %v1410 = vadd.f32 0.0, %v1409
        %1411 = vdwg.mxu0
        %v1412 = vadd.f32 %v1410, %v476
        %v1413 = vxor.u32 %v1412, 2147483648
        %v1414 = vmul.f32 %v1413, 1.442695
        %v1415 = vpow.pop %v1414
        %v1416 = vadd.f32 %v1415, 1.0
        %v1417 = vrcp.pop %v1416
        %v1418 = vmul.f32 %v1416, %v1417
        %v1419 = vsub.f32 1.0, %v1418
        %v1420 = vmul.f32 %v1417, %v1419
        %v1421 = vadd.f32 %v1417, %v1420
        %vm1422 = vweird.f32 %v1416
        %vm1423 = vweird.f32 %v1417
        %vm1424 = vmor %vm1422, %vm1423
        %v1425 = vsel %vm1424, %v1417, %v1421
        %v1426 = vand.u32 2147483647, %v1416
        %vm1427 = vcmp.eq.f32.partialorder %v1426, 8.507059e+37
        %v1428 = vand.u32 %v1416, 2147483648
        %v1429 = vor.u32 1.1754944e-38, %v1428
        %v1430 = vsel %vm1427, %v1429, %v1425
        %v1431 = vmul.f32 1.0, %v1430
        %v1432 = vadd.f32 %v1410, %v499
        %v1433 = vxor.u32 %v1432, 2147483648
        %v1434 = vmul.f32 %v1433, 1.442695
        %v1435 = vpow.pop %v1434
        %v1436 = vadd.f32 %v1435, 1.0
        %v1437 = vrcp.pop %v1436
        %v1438 = vmul.f32 %v1436, %v1437
        %v1439 = vsub.f32 1.0, %v1438
        %v1440 = vmul.f32 %v1437, %v1439
        %v1441 = vadd.f32 %v1437, %v1440
        %vm1442 = vweird.f32 %v1436
        %vm1443 = vweird.f32 %v1437
        %vm1444 = vmor %vm1442, %vm1443
        %v1445 = vsel %vm1444, %v1437, %v1441
        %v1446 = vand.u32 2147483647, %v1436
        %vm1447 = vcmp.eq.f32.partialorder %v1446, 8.507059e+37
        %v1448 = vand.u32 %v1436, 2147483648
        %v1449 = vor.u32 1.1754944e-38, %v1448
        %v1450 = vsel %vm1447, %v1449, %v1445
        %v1451 = vmul.f32 1.0, %v1450
        %v1452 = vld [vmem:[%s329 + $0x8] sm:$0x1]
        %v1453 = vperm.slane %v1452, 0
        %vm1454 = vcmp.eq.s32.totalorder %v366, %v1453
        %vm1455 = vcmp.eq.s32.totalorder %v367, %v1453
        %vm1456 = vcmp.eq.s32.totalorder %v368, %v1453
        %vm1457 = vcmp.eq.s32.totalorder %v369, %v1453
        %vm1458 = vcmp.eq.s32.totalorder %v370, %v1453
        %vm1459 = vcmp.eq.s32.totalorder %v371, %v1453
        %vm1460 = vcmp.eq.s32.totalorder %v372, %v1453
        %vm1461 = vcmp.eq.s32.totalorder %v373, %v1453
        %vm1462 = vcmp.eq.s32.totalorder %v374, %v1453
        %vm1463 = vcmp.eq.s32.totalorder %v375, %v1453
        %vm1464 = vcmp.eq.s32.totalorder %v376, %v1453
        %vm1465 = vcmp.eq.s32.totalorder %v377, %v1453
        %vm1466 = vcmp.eq.s32.totalorder %v378, %v1453
        %vm1467 = vcmp.eq.s32.totalorder %v379, %v1453
        %vm1468 = vcmp.eq.s32.totalorder %v380, %v1453
        %vm1469 = vcmp.eq.s32.totalorder %v381, %v1453
        %v1470 = vsel %vm1454, 1, 0
        %v1471 = vsel %vm1455, 1, 0
        %v1472 = vsel %vm1456, 1, 0
        %v1473 = vsel %vm1457, 1, 0
        %v1474 = vsel %vm1458, 1, 0
        %v1475 = vsel %vm1459, 1, 0
        %v1476 = vsel %vm1460, 1, 0
        %v1477 = vsel %vm1461, 1, 0
        %v1478 = vsel %vm1462, 1, 0
        %v1479 = vsel %vm1463, 1, 0
        %v1480 = vsel %vm1464, 1, 0
        %v1481 = vsel %vm1465, 1, 0
        %v1482 = vsel %vm1466, 1, 0
        %v1483 = vsel %vm1467, 1, 0
        %v1484 = vsel %vm1468, 1, 0
        %v1485 = vsel %vm1469, 1, 0
        %v1486 = vcvt.s32.f32 %v1470
        %v1487 = vcvt.s32.f32 %v1471
        %v1488 = vcvt.s32.f32 %v1472
        %v1489 = vcvt.s32.f32 %v1473
        %v1490 = vcvt.s32.f32 %v1474
        %v1491 = vcvt.s32.f32 %v1475
        %v1492 = vcvt.s32.f32 %v1476
        %v1493 = vcvt.s32.f32 %v1477
        %v1494 = vcvt.s32.f32 %v1478
        %v1495 = vcvt.s32.f32 %v1479
        %v1496 = vcvt.s32.f32 %v1480
        %v1497 = vcvt.s32.f32 %v1481
        %v1498 = vcvt.s32.f32 %v1482
        %v1499 = vcvt.s32.f32 %v1483
        %v1500 = vcvt.s32.f32 %v1484
        %v1501 = vcvt.s32.f32 %v1485
        %1502 = vmatpush.msra.mxu0 %v1501
        %1503 = vmatpush.msra.mxu0 %v1500
        %1504 = vmatpush.msra.mxu0 %v1499
        %1505 = vmatpush.msra.mxu0 %v1498
        %1506 = vmatpush.msra.mxu0 %v1497
        %1507 = vmatpush.msra.mxu0 %v1496
        %1508 = vmatpush.msra.mxu0 %v1495
        %1509 = vmatpush.msra.mxu0 %v1494
        %1510 = vmatpush.msra.mxu0 %v1493
        %1511 = vmatpush.msra.mxu0 %v1492
        %1512 = vmatpush.msra.mxu0 %v1491
        %1513 = vmatpush.msra.mxu0 %v1490
        %1514 = vmatpush.msra.mxu0 %v1489
        %1515 = vmatpush.msra.mxu0 %v1488
        %1516 = vmatpush.msra.mxu0 %v1487
        %1517 = vmatpush.msra.mxu0 %v1486
        %1518 = vmatmul.f32.gmra.mxu0 %v330
        %v1519 = vpop.f32.mrf.mxu0
        %v1520 = vadd.f32 0.0, %v1519
        %1521 = vmatmul.f32.gmra.mxu0 %v331
        %v1522 = vpop.f32.mrf.mxu0
        %v1523 = vadd.f32 0.0, %v1522
        %1524 = vdwg.mxu0
        %1525 = vmatpush.msra.mxu0 0.0
        %1526 = vmatpush.msra.mxu0 0.0
        %1527 = vmatpush.msra.mxu0 0.0
        %1528 = vmatpush.msra.mxu0 0.0
        %1529 = vmatpush.msra.mxu0 0.0
        %1530 = vmatpush.msra.mxu0 0.0
        %1531 = vmatpush.msra.mxu0 0.0
        %1532 = vmatpush.msra.mxu0 0.0
        %1533 = vmatpush.msra.mxu0 0.0
        %1534 = vmatpush.msra.mxu0 0.0
        %1535 = vmatpush.msra.mxu0 0.0
        %1536 = vmatpush.msra.mxu0 0.0
        %1537 = vmatpush.msra.mxu0 0.0
        %1538 = vmatpush.msra.mxu0 0.0
        %1539 = vmatpush.msra.mxu0 %v1523
        %1540 = vmatpush.msra.mxu0 %v1520
        %1541 = vmatmul.f32.gmra.mxu0 %v339
        %v1542 = vpop.f32.mrf.mxu0
        %v1543 = vadd.f32 0.0, %v1542
        %1544 = vdwg.mxu0
        %v1545 = vadd.f32 %v1543, %v476
        %v1546 = vxor.u32 %v1545, 2147483648
        %v1547 = vmul.f32 %v1546, 1.442695
        %v1548 = vpow.pop %v1547
        %v1549 = vadd.f32 %v1548, 1.0
        %v1550 = vrcp.pop %v1549
        %v1551 = vmul.f32 %v1549, %v1550
        %v1552 = vsub.f32 1.0, %v1551
        %v1553 = vmul.f32 %v1550, %v1552
        %v1554 = vadd.f32 %v1550, %v1553
        %vm1555 = vweird.f32 %v1549
        %vm1556 = vweird.f32 %v1550
        %vm1557 = vmor %vm1555, %vm1556
        %v1558 = vsel %vm1557, %v1550, %v1554
        %v1559 = vand.u32 2147483647, %v1549
        %vm1560 = vcmp.eq.f32.partialorder %v1559, 8.507059e+37
        %v1561 = vand.u32 %v1549, 2147483648
        %v1562 = vor.u32 1.1754944e-38, %v1561
        %v1563 = vsel %vm1560, %v1562, %v1558
        %v1564 = vmul.f32 1.0, %v1563
        %v1565 = vadd.f32 %v1543, %v499
        %v1566 = vxor.u32 %v1565, 2147483648
        %v1567 = vmul.f32 %v1566, 1.442695
        %v1568 = vpow.pop %v1567
        %v1569 = vadd.f32 %v1568, 1.0
        %v1570 = vrcp.pop %v1569
        %v1571 = vmul.f32 %v1569, %v1570
        %v1572 = vsub.f32 1.0, %v1571
        %v1573 = vmul.f32 %v1570, %v1572
        %v1574 = vadd.f32 %v1570, %v1573
        %vm1575 = vweird.f32 %v1569
        %vm1576 = vweird.f32 %v1570
        %vm1577 = vmor %vm1575, %vm1576
        %v1578 = vsel %vm1577, %v1570, %v1574
        %v1579 = vand.u32 2147483647, %v1569
        %vm1580 = vcmp.eq.f32.partialorder %v1579, 8.507059e+37
        %v1581 = vand.u32 %v1569, 2147483648
        %v1582 = vor.u32 1.1754944e-38, %v1581
        %v1583 = vsel %vm1580, %v1582, %v1578
        %v1584 = vmul.f32 1.0, %v1583
        %v1585 = vld [vmem:[%s329 + $0x9] sm:$0x1]
        %v1586 = vperm.slane %v1585, 0
        %vm1587 = vcmp.eq.s32.totalorder %v366, %v1586
        %vm1588 = vcmp.eq.s32.totalorder %v367, %v1586
        %vm1589 = vcmp.eq.s32.totalorder %v368, %v1586
        %vm1590 = vcmp.eq.s32.totalorder %v369, %v1586
        %vm1591 = vcmp.eq.s32.totalorder %v370, %v1586
        %vm1592 = vcmp.eq.s32.totalorder %v371, %v1586
        %vm1593 = vcmp.eq.s32.totalorder %v372, %v1586
        %vm1594 = vcmp.eq.s32.totalorder %v373, %v1586
        %vm1595 = vcmp.eq.s32.totalorder %v374, %v1586
        %vm1596 = vcmp.eq.s32.totalorder %v375, %v1586
        %vm1597 = vcmp.eq.s32.totalorder %v376, %v1586
        %vm1598 = vcmp.eq.s32.totalorder %v377, %v1586
        %vm1599 = vcmp.eq.s32.totalorder %v378, %v1586
        %vm1600 = vcmp.eq.s32.totalorder %v379, %v1586
        %vm1601 = vcmp.eq.s32.totalorder %v380, %v1586
        %vm1602 = vcmp.eq.s32.totalorder %v381, %v1586
        %v1603 = vsel %vm1587, 1, 0
        %v1604 = vsel %vm1588, 1, 0
        %v1605 = vsel %vm1589, 1, 0
        %v1606 = vsel %vm1590, 1, 0
        %v1607 = vsel %vm1591, 1, 0
        %v1608 = vsel %vm1592, 1, 0
        %v1609 = vsel %vm1593, 1, 0
        %v1610 = vsel %vm1594, 1, 0
        %v1611 = vsel %vm1595, 1, 0
        %v1612 = vsel %vm1596, 1, 0
        %v1613 = vsel %vm1597, 1, 0
        %v1614 = vsel %vm1598, 1, 0
        %v1615 = vsel %vm1599, 1, 0
        %v1616 = vsel %vm1600, 1, 0
        %v1617 = vsel %vm1601, 1, 0
        %v1618 = vsel %vm1602, 1, 0
        %v1619 = vcvt.s32.f32 %v1603
        %v1620 = vcvt.s32.f32 %v1604
        %v1621 = vcvt.s32.f32 %v1605
        %v1622 = vcvt.s32.f32 %v1606
        %v1623 = vcvt.s32.f32 %v1607
        %v1624 = vcvt.s32.f32 %v1608
        %v1625 = vcvt.s32.f32 %v1609
        %v1626 = vcvt.s32.f32 %v1610
        %v1627 = vcvt.s32.f32 %v1611
        %v1628 = vcvt.s32.f32 %v1612
        %v1629 = vcvt.s32.f32 %v1613
        %v1630 = vcvt.s32.f32 %v1614
        %v1631 = vcvt.s32.f32 %v1615
        %v1632 = vcvt.s32.f32 %v1616
        %v1633 = vcvt.s32.f32 %v1617
        %v1634 = vcvt.s32.f32 %v1618
        %1635 = vmatpush.msra.mxu0 %v1634
        %1636 = vmatpush.msra.mxu0 %v1633
        %1637 = vmatpush.msra.mxu0 %v1632
        %1638 = vmatpush.msra.mxu0 %v1631
        %1639 = vmatpush.msra.mxu0 %v1630
        %1640 = vmatpush.msra.mxu0 %v1629
        %1641 = vmatpush.msra.mxu0 %v1628
        %1642 = vmatpush.msra.mxu0 %v1627
        %1643 = vmatpush.msra.mxu0 %v1626
        %1644 = vmatpush.msra.mxu0 %v1625
        %1645 = vmatpush.msra.mxu0 %v1624
        %1646 = vmatpush.msra.mxu0 %v1623
        %1647 = vmatpush.msra.mxu0 %v1622
        %1648 = vmatpush.msra.mxu0 %v1621
        %1649 = vmatpush.msra.mxu0 %v1620
        %1650 = vmatpush.msra.mxu0 %v1619
        %1651 = vmatmul.f32.gmra.mxu0 %v330
        %v1652 = vpop.f32.mrf.mxu0
        %v1653 = vadd.f32 0.0, %v1652
        %1654 = vmatmul.f32.gmra.mxu0 %v331
        %v1655 = vpop.f32.mrf.mxu0
        %v1656 = vadd.f32 0.0, %v1655
        %1657 = vdwg.mxu0
        %1658 = vmatpush.msra.mxu0 0.0
        %1659 = vmatpush.msra.mxu0 0.0
        %1660 = vmatpush.msra.mxu0 0.0
        %1661 = vmatpush.msra.mxu0 0.0
        %1662 = vmatpush.msra.mxu0 0.0
        %1663 = vmatpush.msra.mxu0 0.0
        %1664 = vmatpush.msra.mxu0 0.0
        %1665 = vmatpush.msra.mxu0 0.0
        %1666 = vmatpush.msra.mxu0 0.0
        %1667 = vmatpush.msra.mxu0 0.0
        %1668 = vmatpush.msra.mxu0 0.0
        %1669 = vmatpush.msra.mxu0 0.0
        %1670 = vmatpush.msra.mxu0 0.0
        %1671 = vmatpush.msra.mxu0 0.0
        %1672 = vmatpush.msra.mxu0 %v1656
        %1673 = vmatpush.msra.mxu0 %v1653
        %1674 = vmatmul.f32.gmra.mxu0 %v339
        %v1675 = vpop.f32.mrf.mxu0
        %v1676 = vadd.f32 0.0, %v1675
        %1677 = vdwg.mxu0
        %v1678 = vadd.f32 %v1676, %v476
        %v1679 = vxor.u32 %v1678, 2147483648
        %v1680 = vmul.f32 %v1679, 1.442695
        %v1681 = vpow.pop %v1680
        %v1682 = vadd.f32 %v1681, 1.0
        %v1683 = vrcp.pop %v1682
        %v1684 = vmul.f32 %v1682, %v1683
        %v1685 = vsub.f32 1.0, %v1684
        %v1686 = vmul.f32 %v1683, %v1685
        %v1687 = vadd.f32 %v1683, %v1686
        %vm1688 = vweird.f32 %v1682
        %vm1689 = vweird.f32 %v1683
        %vm1690 = vmor %vm1688, %vm1689
        %v1691 = vsel %vm1690, %v1683, %v1687
        %v1692 = vand.u32 2147483647, %v1682
        %vm1693 = vcmp.eq.f32.partialorder %v1692, 8.507059e+37
        %v1694 = vand.u32 %v1682, 2147483648
        %v1695 = vor.u32 1.1754944e-38, %v1694
        %v1696 = vsel %vm1693, %v1695, %v1691
        %v1697 = vmul.f32 1.0, %v1696
        %v1698 = vadd.f32 %v1676, %v499
        %v1699 = vxor.u32 %v1698, 2147483648
        %v1700 = vmul.f32 %v1699, 1.442695
        %v1701 = vpow.pop %v1700
        %v1702 = vadd.f32 %v1701, 1.0
        %v1703 = vrcp.pop %v1702
        %v1704 = vmul.f32 %v1702, %v1703
        %v1705 = vsub.f32 1.0, %v1704
        %v1706 = vmul.f32 %v1703, %v1705
        %v1707 = vadd.f32 %v1703, %v1706
        %vm1708 = vweird.f32 %v1702
        %vm1709 = vweird.f32 %v1703
        %vm1710 = vmor %vm1708, %vm1709
        %v1711 = vsel %vm1710, %v1703, %v1707
        %v1712 = vand.u32 2147483647, %v1702
        %vm1713 = vcmp.eq.f32.partialorder %v1712, 8.507059e+37
        %v1714 = vand.u32 %v1702, 2147483648
        %v1715 = vor.u32 1.1754944e-38, %v1714
        %v1716 = vsel %vm1713, %v1715, %v1711
        %v1717 = vmul.f32 1.0, %v1716
        %v1718 = vmax.f32 %v497, %v633
        %v1719 = vmax.f32 %v1718, %v766
        %v1720 = vmax.f32 %v1719, %v899
        %v1721 = vmax.f32 %v1720, %v1032
        %v1722 = vmax.f32 %v1721, %v1165
        %v1723 = vmax.f32 %v1722, %v1298
        %v1724 = vmax.f32 %v1723, %v1431
        %v1725 = vmax.f32 %v1724, %v1564
        %v1726 = vmax.f32 %v1725, %v1697
        %vm1727 = vcmp.eq.f32.partialorder %v497, %v1726
        %v1729 = vrot.slane %v520, 2
        %v1731 = vsel %vm1727, %v1729, 0.0
        %v1732 = vsel %vm1727, -1e+30, %v497
        %vm1733 = vcmp.eq.f32.partialorder %v633, %v1726
        %vm1734 = vmxor %vm1727, 1
        %vm1735 = vmand %vm1733, %vm1734
        %vm1736 = vmor %vm1727, %vm1735
        %v1738 = vrot.slane %v653, 2
        %v1740 = vsel %vm1735, %v1738, 0.0
        %v1741 = vsel %vm1735, -1e+30, %v633
        %vm1742 = vcmp.eq.f32.partialorder %v766, %v1726
        %vm1743 = vmxor %vm1736, 1
        %vm1744 = vmand %vm1742, %vm1743
        %vm1745 = vmor %vm1736, %vm1744
        %v1747 = vrot.slane %v786, 2
        %v1749 = vsel %vm1744, %v1747, 0.0
        %v1750 = vsel %vm1744, -1e+30, %v766
        %vm1751 = vcmp.eq.f32.partialorder %v899, %v1726
        %vm1752 = vmxor %vm1745, 1
        %vm1753 = vmand %vm1751, %vm1752
        %vm1754 = vmor %vm1745, %vm1753
        %v1756 = vrot.slane %v919, 2
        %v1758 = vsel %vm1753, %v1756, 0.0
        %v1759 = vsel %vm1753, -1e+30, %v899
        %vm1760 = vcmp.eq.f32.partialorder %v1032, %v1726
        %vm1761 = vmxor %vm1754, 1
        %vm1762 = vmand %vm1760, %vm1761
        %vm1763 = vmor %vm1754, %vm1762
        %v1765 = vrot.slane %v1052, 2
        %v1767 = vsel %vm1762, %v1765, 0.0
        %v1768 = vsel %vm1762, -1e+30, %v1032
        %vm1769 = vcmp.eq.f32.partialorder %v1165, %v1726
        %vm1770 = vmxor %vm1763, 1
        %vm1771 = vmand %vm1769, %vm1770
        %vm1772 = vmor %vm1763, %vm1771
        %v1774 = vrot.slane %v1185, 2
        %v1776 = vsel %vm1771, %v1774, 0.0
        %v1777 = vsel %vm1771, -1e+30, %v1165
        %vm1778 = vcmp.eq.f32.partialorder %v1298, %v1726
        %vm1779 = vmxor %vm1772, 1
        %vm1780 = vmand %vm1778, %vm1779
        %vm1781 = vmor %vm1772, %vm1780
        %v1783 = vrot.slane %v1318, 2
        %v1785 = vsel %vm1780, %v1783, 0.0
        %v1786 = vsel %vm1780, -1e+30, %v1298
        %vm1787 = vcmp.eq.f32.partialorder %v1431, %v1726
        %vm1788 = vmxor %vm1781, 1
        %vm1789 = vmand %vm1787, %vm1788
        %vm1790 = vmor %vm1781, %vm1789
        %v1792 = vrot.slane %v1451, 2
        %v1794 = vsel %vm1789, %v1792, 0.0
        %v1795 = vsel %vm1789, -1e+30, %v1431
        %vm1796 = vcmp.eq.f32.partialorder %v1564, %v1726
        %vm1797 = vmxor %vm1790, 1
        %vm1798 = vmand %vm1796, %vm1797
        %vm1799 = vmor %vm1790, %vm1798
        %v1801 = vrot.slane %v1584, 2
        %v1803 = vsel %vm1798, %v1801, 0.0
        %v1804 = vsel %vm1798, -1e+30, %v1564
        %vm1805 = vcmp.eq.f32.partialorder %v1697, %v1726
        %vm1806 = vmxor %vm1799, 1
        %vm1807 = vmand %vm1805, %vm1806
        %v1809 = vrot.slane %v1717, 2
        %v1811 = vsel %vm1807, %v1809, 0.0
        %v1812 = vsel %vm1807, -1e+30, %v1697
        %v1813 = vmax.f32 %v1732, %v1741
        %v1814 = vmax.f32 %v1813, %v1750
        %v1815 = vmax.f32 %v1814, %v1759
        %v1816 = vmax.f32 %v1815, %v1768
        %v1817 = vmax.f32 %v1816, %v1777
        %v1818 = vmax.f32 %v1817, %v1786
        %v1819 = vmax.f32 %v1818, %v1795
        %v1820 = vmax.f32 %v1819, %v1804
        %v1821 = vmax.f32 %v1820, %v1812
        %vm1822 = vcmp.eq.f32.partialorder %v1732, %v1821
        %v1823 = vsel %vm1822, %v1729, %v1731
        %v1824 = vsel %vm1822, -1e+30, %v1732
        %vm1825 = vcmp.eq.f32.partialorder %v1741, %v1821
        %vm1826 = vmxor %vm1822, 1
        %vm1827 = vmand %vm1825, %vm1826
        %vm1828 = vmor %vm1822, %vm1827
        %v1829 = vsel %vm1827, %v1738, %v1740
        %v1830 = vsel %vm1827, -1e+30, %v1741
        %vm1831 = vcmp.eq.f32.partialorder %v1750, %v1821
        %vm1832 = vmxor %vm1828, 1
        %vm1833 = vmand %vm1831, %vm1832
        %vm1834 = vmor %vm1828, %vm1833
        %v1835 = vsel %vm1833, %v1747, %v1749
        %v1836 = vsel %vm1833, -1e+30, %v1750
        %vm1837 = vcmp.eq.f32.partialorder %v1759, %v1821
        %vm1838 = vmxor %vm1834, 1
        %vm1839 = vmand %vm1837, %vm1838
        %vm1840 = vmor %vm1834, %vm1839
        %v1841 = vsel %vm1839, %v1756, %v1758
        %v1842 = vsel %vm1839, -1e+30, %v1759
        %vm1843 = vcmp.eq.f32.partialorder %v1768, %v1821
        %vm1844 = vmxor %vm1840, 1
        %vm1845 = vmand %vm1843, %vm1844
        %vm1846 = vmor %vm1840, %vm1845
        %v1847 = vsel %vm1845, %v1765, %v1767
        %v1848 = vsel %vm1845, -1e+30, %v1768
        %vm1849 = vcmp.eq.f32.partialorder %v1777, %v1821
        %vm1850 = vmxor %vm1846, 1
        %vm1851 = vmand %vm1849, %vm1850
        %vm1852 = vmor %vm1846, %vm1851
        %v1853 = vsel %vm1851, %v1774, %v1776
        %v1854 = vsel %vm1851, -1e+30, %v1777
        %vm1855 = vcmp.eq.f32.partialorder %v1786, %v1821
        %vm1856 = vmxor %vm1852, 1
        %vm1857 = vmand %vm1855, %vm1856
        %vm1858 = vmor %vm1852, %vm1857
        %v1859 = vsel %vm1857, %v1783, %v1785
        %v1860 = vsel %vm1857, -1e+30, %v1786
        %vm1861 = vcmp.eq.f32.partialorder %v1795, %v1821
        %vm1862 = vmxor %vm1858, 1
        %vm1863 = vmand %vm1861, %vm1862
        %vm1864 = vmor %vm1858, %vm1863
        %v1865 = vsel %vm1863, %v1792, %v1794
        %v1866 = vsel %vm1863, -1e+30, %v1795
        %vm1867 = vcmp.eq.f32.partialorder %v1804, %v1821
        %vm1868 = vmxor %vm1864, 1
        %vm1869 = vmand %vm1867, %vm1868
        %vm1870 = vmor %vm1864, %vm1869
        %v1871 = vsel %vm1869, %v1801, %v1803
        %v1872 = vsel %vm1869, -1e+30, %v1804
        %vm1873 = vcmp.eq.f32.partialorder %v1812, %v1821
        %vm1874 = vmxor %vm1870, 1
        %vm1875 = vmand %vm1873, %vm1874
        %v1876 = vsel %vm1875, %v1809, %v1811
        %v1877 = vsel %vm1875, -1e+30, %v1812
        %v1878 = vmax.f32 %v1824, %v1830
        %v1879 = vmax.f32 %v1878, %v1836
        %v1880 = vmax.f32 %v1879, %v1842
        %v1881 = vmax.f32 %v1880, %v1848
        %v1882 = vmax.f32 %v1881, %v1854
        %v1883 = vmax.f32 %v1882, %v1860
        %v1884 = vmax.f32 %v1883, %v1866
        %v1885 = vmax.f32 %v1884, %v1872
        %v1886 = vmax.f32 %v1885, %v1877
        %vm1887 = vcmp.eq.f32.partialorder %v1824, %v1886
        %v1888 = vsel %vm1887, %v1729, %v1823
        %v1889 = vsel %vm1887, -1e+30, %v1824
        %vm1890 = vcmp.eq.f32.partialorder %v1830, %v1886
        %vm1891 = vmxor %vm1887, 1
        %vm1892 = vmand %vm1890, %vm1891
        %vm1893 = vmor %vm1887, %vm1892
        %v1894 = vsel %vm1892, %v1738, %v1829
        %v1895 = vsel %vm1892, -1e+30, %v1830
        %vm1896 = vcmp.eq.f32.partialorder %v1836, %v1886
        %vm1897 = vmxor %vm1893, 1
        %vm1898 = vmand %vm1896, %vm1897
        %vm1899 = vmor %vm1893, %vm1898
        %v1900 = vsel %vm1898, %v1747, %v1835
        %v1901 = vsel %vm1898, -1e+30, %v1836
        %vm1902 = vcmp.eq.f32.partialorder %v1842, %v1886
        %vm1903 = vmxor %vm1899, 1
        %vm1904 = vmand %vm1902, %vm1903
        %vm1905 = vmor %vm1899, %vm1904
        %v1906 = vsel %vm1904, %v1756, %v1841
        %v1907 = vsel %vm1904, -1e+30, %v1842
        %vm1908 = vcmp.eq.f32.partialorder %v1848, %v1886
        %vm1909 = vmxor %vm1905, 1
        %vm1910 = vmand %vm1908, %vm1909
        %vm1911 = vmor %vm1905, %vm1910
        %v1912 = vsel %vm1910, %v1765, %v1847
        %v1913 = vsel %vm1910, -1e+30, %v1848
        %vm1914 = vcmp.eq.f32.partialorder %v1854, %v1886
        %vm1915 = vmxor %vm1911, 1
        %vm1916 = vmand %vm1914, %vm1915
        %vm1917 = vmor %vm1911, %vm1916
        %v1918 = vsel %vm1916, %v1774, %v1853
        %v1919 = vsel %vm1916, -1e+30, %v1854
        %vm1920 = vcmp.eq.f32.partialorder %v1860, %v1886
        %vm1921 = vmxor %vm1917, 1
        %vm1922 = vmand %vm1920, %vm1921
        %vm1923 = vmor %vm1917, %vm1922
        %v1924 = vsel %vm1922, %v1783, %v1859
        %v1925 = vsel %vm1922, -1e+30, %v1860
        %vm1926 = vcmp.eq.f32.partialorder %v1866, %v1886
        %vm1927 = vmxor %vm1923, 1
        %vm1928 = vmand %vm1926, %vm1927
        %vm1929 = vmor %vm1923, %vm1928
        %v1930 = vsel %vm1928, %v1792, %v1865
        %v1931 = vsel %vm1928, -1e+30, %v1866
        %vm1932 = vcmp.eq.f32.partialorder %v1872, %v1886
        %vm1933 = vmxor %vm1929, 1
        %vm1934 = vmand %vm1932, %vm1933
        %vm1935 = vmor %vm1929, %vm1934
        %v1936 = vsel %vm1934, %v1801, %v1871
        %v1937 = vsel %vm1934, -1e+30, %v1872
        %vm1938 = vcmp.eq.f32.partialorder %v1877, %v1886
        %vm1939 = vmxor %vm1935, 1
        %vm1940 = vmand %vm1938, %vm1939
        %v1941 = vsel %vm1940, %v1809, %v1876
        %v1942 = vsel %vm1940, -1e+30, %v1877
        %v1943 = vmax.f32 %v1889, %v1895
        %v1944 = vmax.f32 %v1943, %v1901
        %v1945 = vmax.f32 %v1944, %v1907
        %v1946 = vmax.f32 %v1945, %v1913
        %v1947 = vmax.f32 %v1946, %v1919
        %v1948 = vmax.f32 %v1947, %v1925
        %v1949 = vmax.f32 %v1948, %v1931
        %v1950 = vmax.f32 %v1949, %v1937
        %v1951 = vmax.f32 %v1950, %v1942
        %vm1952 = vcmp.eq.f32.partialorder %v1889, %v1951
        %v1953 = vsel %vm1952, %v1729, %v1888
        %vm1954 = vcmp.eq.f32.partialorder %v1895, %v1951
        %vm1955 = vmxor %vm1952, 1
        %vm1956 = vmand %vm1954, %vm1955
        %vm1957 = vmor %vm1952, %vm1956
        %v1958 = vsel %vm1956, %v1738, %v1894
        %vm1959 = vcmp.eq.f32.partialorder %v1901, %v1951
        %vm1960 = vmxor %vm1957, 1
        %vm1961 = vmand %vm1959, %vm1960
        %vm1962 = vmor %vm1957, %vm1961
        %v1963 = vsel %vm1961, %v1747, %v1900
        %vm1964 = vcmp.eq.f32.partialorder %v1907, %v1951
        %vm1965 = vmxor %vm1962, 1
        %vm1966 = vmand %vm1964, %vm1965
        %vm1967 = vmor %vm1962, %vm1966
        %v1968 = vsel %vm1966, %v1756, %v1906
        %vm1969 = vcmp.eq.f32.partialorder %v1913, %v1951
        %vm1970 = vmxor %vm1967, 1
        %vm1971 = vmand %vm1969, %vm1970
        %vm1972 = vmor %vm1967, %vm1971
        %v1973 = vsel %vm1971, %v1765, %v1912
        %vm1974 = vcmp.eq.f32.partialorder %v1919, %v1951
        %vm1975 = vmxor %vm1972, 1
        %vm1976 = vmand %vm1974, %vm1975
        %vm1977 = vmor %vm1972, %vm1976
        %v1978 = vsel %vm1976, %v1774, %v1918
        %vm1979 = vcmp.eq.f32.partialorder %v1925, %v1951
        %vm1980 = vmxor %vm1977, 1
        %vm1981 = vmand %vm1979, %vm1980
        %vm1982 = vmor %vm1977, %vm1981
        %v1983 = vsel %vm1981, %v1783, %v1924
        %vm1984 = vcmp.eq.f32.partialorder %v1931, %v1951
        %vm1985 = vmxor %vm1982, 1
        %vm1986 = vmand %vm1984, %vm1985
        %vm1987 = vmor %vm1982, %vm1986
        %v1988 = vsel %vm1986, %v1792, %v1930
        %vm1989 = vcmp.eq.f32.partialorder %v1937, %v1951
        %vm1990 = vmxor %vm1987, 1
        %vm1991 = vmand %vm1989, %vm1990
        %vm1992 = vmor %vm1987, %vm1991
        %v1993 = vsel %vm1991, %v1801, %v1936
        %vm1994 = vcmp.eq.f32.partialorder %v1942, %v1951
        %vm1995 = vmxor %vm1992, 1
        %vm1996 = vmand %vm1994, %vm1995
        %v1997 = vsel %vm1996, %v1809, %v1941
        %v1998 = vperm.slane %v1953, 1
        %v1999 = vmul.f32 %v450, %v1998
        %v2000 = vmul.f32 %v453, %v1998
        %v2001 = vadd.f32 %v1999, 0.0
        %v2002 = vadd.f32 %v2000, 0.0
        %v2003 = vperm.slane %v1958, 1
        %v2004 = vmul.f32 %v589, %v2003
        %v2005 = vmul.f32 %v592, %v2003
        %v2006 = vadd.f32 %v2001, %v2004
        %v2007 = vadd.f32 %v2002, %v2005
        %v2008 = vperm.slane %v1963, 1
        %v2009 = vmul.f32 %v722, %v2008
        %v2010 = vmul.f32 %v725, %v2008
        %v2011 = vadd.f32 %v2006, %v2009
        %v2012 = vadd.f32 %v2007, %v2010
        %v2013 = vperm.slane %v1968, 1
        %v2014 = vmul.f32 %v855, %v2013
        %v2015 = vmul.f32 %v858, %v2013
        %v2016 = vadd.f32 %v2011, %v2014
        %v2017 = vadd.f32 %v2012, %v2015
        %v2018 = vperm.slane %v1973, 1
        %v2019 = vmul.f32 %v988, %v2018
        %v2020 = vmul.f32 %v991, %v2018
        %v2021 = vadd.f32 %v2016, %v2019
        %v2022 = vadd.f32 %v2017, %v2020
        %v2023 = vperm.slane %v1978, 1
        %v2024 = vmul.f32 %v1121, %v2023
        %v2025 = vmul.f32 %v1124, %v2023
        %v2026 = vadd.f32 %v2021, %v2024
        %v2027 = vadd.f32 %v2022, %v2025
        %v2028 = vperm.slane %v1983, 1
        %v2029 = vmul.f32 %v1254, %v2028
        %v2030 = vmul.f32 %v1257, %v2028
        %v2031 = vadd.f32 %v2026, %v2029
        %v2032 = vadd.f32 %v2027, %v2030
        %v2033 = vperm.slane %v1988, 1
        %v2034 = vmul.f32 %v1387, %v2033
        %v2035 = vmul.f32 %v1390, %v2033
        %v2036 = vadd.f32 %v2031, %v2034
        %v2037 = vadd.f32 %v2032, %v2035
        %v2038 = vperm.slane %v1993, 1
        %v2039 = vmul.f32 %v1520, %v2038
        %v2040 = vmul.f32 %v1523, %v2038
        %v2041 = vadd.f32 %v2036, %v2039
        %v2042 = vadd.f32 %v2037, %v2040
        %v2043 = vperm.slane %v1997, 1
        %v2044 = vmul.f32 %v1653, %v2043
        %v2045 = vmul.f32 %v1656, %v2043
        %v2046 = vadd.f32 %v2041, %v2044
        %v2047 = vadd.f32 %v2042, %v2045
        %v2048 = vadd.f32 %v332, %v2046
        %v2049 = vadd.f32 %v333, %v2047
        %2050 = vst [vmem:[%s315] sm:$0xff] %v2048
        %2051 = vst [vmem:[%s315 + $0x8] sm:$0xff] %v2049
        %s2052 = sand.u32 %s169, 1
        %s2053 = scalar_lea.sflag [#allocation4], %s2052
        %s2054 = sand.u32 %s169, 1
        %s2055 = smul.addr %s2054, 16
        %s2056 = scalar_lea.vmem [#allocation7], %s2055
        // Predicated region
        $region49: #{tpu_custom_call.1} parent=39 // pred_check
          %p2057 = pneg %p179
        $region50: #{tpu_custom_call.1} parent=39 // pred_check_branch
          %2059 = sbr.rel (%p2057) target = $region52
        $region51: #{tpu_custom_call.1} parent=39 // pred_region
          %2061 = vsyncadd %s2053, 0
          %s2062 = smul.addr %s27, 2
          %s2063 = sadd.s32 %s28, %s2062
          %s2064 = smul.addr %s2063, 8
          %s2065 = scalar_lea.hbm %s5, %s2064
          %s2066 = sshll.u32 %s2056, 4
          %s2067 = int_to_ptr.vmem [resolvable:$true] %s2066
          %s2068 = sshll.u32 %s2065, 4
          %s2069 = int_to_ptr.hbm [resolvable:$true] %s2068
          %2074 = dma.vmem_to_hbm [thread:$0]  %s2067, 256, %s2069, %s2053, 128, 128, 8
        $region52: #{tpu_custom_call.1} parent=39 // pred_fallthru
          _
      $region40: #{tpu_custom_call.1} parent=5 // pred_fallthru
        _
      %p2075 = scmp.le.s32.totalorder 2, %s18
      // Predicated region
      $region53: #{tpu_custom_call.1} parent=5 // pred_check
        %p2076 = pneg %p2075
      $region54: #{tpu_custom_call.1} parent=5 // pred_check_branch
        %2078 = sbr.rel (%p2076) target = $region56
      $region55: #{tpu_custom_call.1} parent=5 // pred_region
        %s2079 = ssub.s32 %s18, 2
        // Predicated region
        $region57: #{tpu_custom_call.1} parent=55 // pred_check
          %p2080 = pneg %p185
        $region58: #{tpu_custom_call.1} parent=55 // pred_check_branch
          %2082 = sbr.rel (%p2080) target = $region60
        $region59: #{tpu_custom_call.1} parent=55 // pred_region
          %s2083 = sand.u32 %s170, 1
          %s2084 = scalar_lea.sflag [#allocation4], %s2083
          %s2085 = sand.u32 %s170, 1
          %s2086 = smul.addr %s2085, 16
          %s2087 = scalar_lea.vmem [#allocation7], %s2086
          %2089 = dma.done %s2084, 256
        $region60: #{tpu_custom_call.1} parent=55 // pred_fallthru
          _
      $region56: #{tpu_custom_call.1} parent=5 // pred_fallthru
        _
    $region6: #{tpu_custom_call.1} parent=1 // loop_footer
      %s22 = sadd.s32 1, %s18
    $region7: #{tpu_custom_call.1} parent=1 // loop_footer_branch
      %17 = sbr.rel target = $region3
    $region8: #{tpu_custom_call.1} parent=1 // loop_exit
      _
    %2090 = vsyncpa [#allocation3], 1
    %s2091 = scalar_lea.sflag [#allocation3], 1
    %2092 = vsyncpa %s2091, 1
    %2093 = vsyncpa [#allocation4], 1
    %s2094 = scalar_lea.sflag [#allocation4], 1
    %2095 = vsyncpa %s2094, 1
    %2096 = vsyncpa [#allocation5], 1
    %s2097 = scalar_lea.sflag [#allocation5], 1
    %2098 = vsyncpa %s2097, 1

</llo_original>
